<compile_context>
chip_gen: v5e
topology: v5e:2x2
jax: 0.10.0
libtpu: 0.0.40
codegen_flags: <defaults>
</compile_context>

<pallas_src>
import math
import functools

import jax
import jax.numpy as jnp
from jax.experimental import pallas as pl
from jax.experimental.pallas import tpu as pltpu

# Make both the in-kernel MXU dots and the pure-JAX reference use full-f32 matmuls so the
# correctness check is not polluted by TPU's default bf16 matmul truncation.
jax.config.update("jax_default_matmul_precision", "highest")

TWO_PI = 2.0 * math.pi
_NEG_BIG = -1e30  # finite "-inf" for padded gene lanes (never -inf: 0 * -inf = NaN)


def _round_up(x, m):
    return (x + m - 1) // m * m


def _decoder_ccvi_kernel(neg_half_inv_sigma_sq, d_col,
                         # batch-tiled inputs
                         z_ref, oh_ref,
                         # grid-invariant parameters
                         headw_ref, scal_ref, mu_ref, wstack_ref,
                         # outputs
                         scale_ref, aux_ref):
    z = z_ref[...]                                   # (bn, D+1); last lane = drug covariate d
    oh = oh_ref[...]                                 # (bn, C)    one-hot cell type
    dcov = z[:, d_col:d_col + 1]                     # (bn, 1)

    phase_b = scal_ref[0]                            # SMEM scalars
    drug_b = scal_ref[1]

    # ---- the two FCLayers(n_layers=1) heads fused into a single (D+1, 2) MXU pass ----
    heads = jnp.dot(z, headw_ref[...], preferred_element_type=jnp.float32)   # (bn, 2)

    # phase decoder: Linear -> ReLU (eval), sigmoid -> theta in [0, 2*pi)
    phase_h = jnp.maximum(heads[:, 0:1] + phase_b, 0.0)
    theta = jax.nn.sigmoid(phase_h) * TWO_PI         # (bn, 1)

    # ---- wrapped RBF activations over the phase ----
    mu = mu_ref[...]                                 # (1, R)
    diff = jnp.abs(theta - mu)
    wrapped = jnp.minimum(diff, TWO_PI - diff)
    rbf_act = jnp.exp(neg_half_inv_sigma_sq * wrapped * wrapped)   # (bn, R)

    # ---- drug response: Linear([z, d]) -> ReLU -> softplus, zeroed for controls ----
    drug_h = jnp.maximum(heads[:, 1:2] + drug_b, 0.0)
    r = jax.nn.softplus(drug_h)                      # (bn, 1)
    r = jnp.where(dcov == 0.0, jnp.zeros_like(r), r)

    # ---- all three eta contributions fused into ONE stacked matmul ----
    # lhs = [rbf_act | one_hot(t) | r]   (bn, R+C+1)
    # W   = [W_rbf*cycle_mask ; b_type ; W_drug]   (R+C+1, G_pad), padded gene lanes of
    # the b_type rows carry -1e30 so they vanish from the softmax below.
    lhs = jnp.concatenate([rbf_act, oh, r], axis=-1).astype(wstack_ref.dtype)
    eta = jnp.dot(lhs, wstack_ref[...], preferred_element_type=jnp.float32)  # (bn, G_pad)

    # ---- softmax over genes (EUP reciprocal + one Newton step on the (bn,1) denom) ----
    m = jnp.max(eta, axis=-1, keepdims=True)
    e = jnp.exp(eta - m)
    denom = jnp.sum(e, axis=-1, keepdims=True)
    inv = pl.reciprocal(denom, approx=True)
    inv = inv * (2.0 - denom * inv)
    scale_ref[...] = e * inv

    # ---- lane-dense aux slab assembled in registers, ONE full-width unmasked store ----
    nr = rbf_act.shape[-1]
    pad_w = aux_ref.shape[-1] - (nr + 2)
    parts = [rbf_act, r, theta]
    if pad_w:
        parts.append(jnp.zeros((rbf_act.shape[0], pad_w), jnp.float32))
    aux_ref[...] = jnp.concatenate(parts, axis=-1)


def _vmem_capacity_bytes():
    try:
        info = pltpu.get_tpu_info()
        cap = getattr(info, "vmem_capacity_bytes", None)
        if cap:
            return int(cap)
    except Exception:
        pass
    return 64 << 20      # conservative fallback (v7x per-TensorCore VMEM)


def _auto_block_n(d_aug, c, g_pad, r, auxw, w_bytes, data_budget_bytes):
    """Largest batch tile (multiple of 8) fitting the budget, counting the
    double-buffered I/O tiles AND the live (bn, G_pad) f32 intermediates."""
    k = r + c + 1
    io_row = 2 * 4 * (d_aug + c + g_pad + auxw)      # double-buffered in/out tiles (f32)
    live_row = 3 * 4 * g_pad                         # eta + e + store staging
    per_row = io_row + live_row
    const_bytes = 2 * (4 * (2 * d_aug + r + 8) + w_bytes * k * g_pad)   # resident params
    avail = max(data_budget_bytes - const_bytes, 1 << 20)
    return max(8, int(avail // per_row) // 8 * 8)


def decoder_ccvi_forward(params, z, library, d, t, *, rbf_sigma=None,
                         block_n=512, weights_dtype=jnp.bfloat16):
    """Pallas forward of DecoderCCVI (scale_activation='softmax', n_layers=1, eval)."""
    N, D = z.shape
    R, G = params["W_rbf"].shape
    C = params["b_type"].shape[0]
    sigma = float(rbf_sigma) if rbf_sigma is not None else TWO_PI / R * 0.5

    G_pad = _round_up(G, 128)          # lane-dense gene axis (unmasked stores, dense MXU N)
    auxw = _round_up(R + 2, 128)       # lane-dense aux slab [rbf | r | theta | 0...]
    d_aug = D + 1

    # ---- grid-invariant prep hoisted out of the kernel ----
    z_aug = jnp.concatenate([z, d], axis=-1).astype(jnp.float32)              # (N, D+1)
    oh = jax.nn.one_hot(t, C, dtype=jnp.float32)                              # (N, C)
    mu = jnp.linspace(0.0, TWO_PI, R + 1)[:-1].reshape(1, R).astype(jnp.float32)

    gpad = G_pad - G
    w_rbf_m = (params["W_rbf"] * params["cycle_mask"].reshape(1, G)).astype(jnp.float32)
    # Padded gene lanes of the b_type rows get -1e30 so eta there is ~-inf and the softmax
    # denominator stays exact (one-hot rows always pick exactly one b_type row).
    w_stack = jnp.concatenate([
        jnp.pad(w_rbf_m, ((0, 0), (0, gpad))),
        jnp.pad(params["b_type"].astype(jnp.float32), ((0, 0), (0, gpad)),
                constant_values=_NEG_BIG),
        jnp.pad(params["W_drug"].reshape(1, G).astype(jnp.float32), ((0, 0), (0, gpad))),
    ], axis=0).astype(weights_dtype)                                          # (R+C+1, G_pad)

    phase_w_aug = jnp.concatenate(
        [params["phase_W"].astype(jnp.float32), jnp.zeros((1, 1), jnp.float32)], axis=0)
    head_w = jnp.concatenate(
        [phase_w_aug, params["drug_W"].astype(jnp.float32)], axis=1)          # (D+1, 2)
    scalars = jnp.concatenate([
        params["phase_b"].reshape(1), params["drug_b"].reshape(1),
    ]).astype(jnp.float32)                                                    # (2,) -> SMEM

    # ---- per-generation VMEM budget + batch-tile sizing ----
    vmem_cap = _vmem_capacity_bytes()
    if vmem_cap >= (100 << 20):            # v5e / v6e: 128 MiB physical VMEM
        data_budget, vmem_limit = 88 << 20, 100 << 20
    else:                                  # v7x: 64 MiB per TensorCore
        data_budget, vmem_limit = 26 << 20, 52 << 20

    w_bytes = jnp.dtype(weights_dtype).itemsize
    bn = min(int(block_n), _auto_block_n(d_aug, C, G_pad, R, auxw, w_bytes, data_budget))
    bn = max(8, (bn // 8) * 8)
    # keep >= 2 grid steps so both TensorCores get work on v7x (free on 1-TC chips)
    bn = max(8, min(bn, _round_up(-(-N // 2), 8)))
    grid = ((N + bn - 1) // bn,)
    # NOTE: no explicit batch padding — Pallas handles the ragged last block; OOB reads
    # are garbage rows (may become NaN) that are never used, OOB writes are dropped.

    batch_spec = lambda shape: pl.BlockSpec(shape, lambda i: (i, 0))
    const_spec = lambda shape: pl.BlockSpec(shape, lambda i: (0, 0))

    out_shape = (
        jax.ShapeDtypeStruct((N, G_pad), jnp.float32),   # px_scale (lane-padded genes)
        jax.ShapeDtypeStruct((N, auxw), jnp.float32),    # packed [rbf | r | theta]
    )

    px_scale_p, aux_p = pl.pallas_call(
        functools.partial(_decoder_ccvi_kernel, -0.5 / (sigma * sigma), D),
        out_shape=out_shape,
        grid=grid,
        in_specs=[
            batch_spec((bn, d_aug)),                              # [z | d]
            batch_spec((bn, C)),                                  # one-hot cell type
            const_spec((d_aug, 2)),                               # fused head weights
            pl.BlockSpec(memory_space=pltpu.MemorySpace.SMEM),    # biases
            const_spec((1, R)),                                   # rbf centers
            const_spec((R + C + 1, G_pad)),                       # stacked eta weights
        ],
        out_specs=[
            batch_spec((bn, G_pad)),
            batch_spec((bn, auxw)),
        ],
        compiler_params=pltpu.CompilerParams(
            dimension_semantics=("parallel",),   # batch axis shards across TCs on v7x
            vmem_limit_bytes=int(vmem_limit),
        ),
    )(z_aug, oh, head_w, scalars, mu, w_stack)

    px_scale = px_scale_p[:, :G]
    rbf_act = aux_p[:, :R]
    r = aux_p[:, R]
    theta = aux_p[:, R + 1:R + 2]

    # Cheap epilogue kept OUT of the kernel (avoids 2 extra (N, G) kernel writebacks):
    disp = jax.nn.softplus(params["disp_raw"])[t]       # exact row gather of (C, G) table
    px_rate = jnp.exp(library) * px_scale

    # match the torch return signature
    return (px_scale, disp, px_rate, None, rbf_act, r, theta,
            params["W_rbf"], params["W_drug"], params["b_type"])


def _reference_forward(params, z, library, d, t, rbf_sigma):
    """Pure-JAX reference mirroring the PyTorch forward (eval mode)."""
    R, G = params["W_rbf"].shape
    mu = jnp.linspace(0.0, TWO_PI, R + 1)[:-1][None, :]
    theta = jax.nn.sigmoid(
        jnp.maximum(z @ params["phase_W"] + params["phase_b"], 0.0)) * TWO_PI   # (N, 1)
    diff = jnp.abs(theta - mu)
    wrapped = jnp.minimum(diff, TWO_PI - diff)
    rbf_act = jnp.exp(-0.5 * (wrapped / rbf_sigma) ** 2)
    cycle_effect = rbf_act @ (params["W_rbf"] * params["cycle_mask"][None, :])
    zin = jnp.concatenate([z, d], axis=-1)
    raw_r = jnp.maximum(zin @ params["drug_W"] + params["drug_b"], 0.0)[:, 0]
    r = jax.nn.softplus(raw_r)
    control = d[:, 0] == 0
    r = jnp.where(control, 0.0, r)
    drug_effect = r[:, None] * params["W_drug"][None, :]
    b_t = params["b_type"][t]
    disp = jax.nn.softplus(params["disp_raw"])[t]
    eta = b_t + cycle_effect + drug_effect
    px_scale = jax.nn.softmax(eta, axis=-1)
    px_rate = jnp.exp(library) * px_scale
    return px_scale, disp, px_rate, rbf_act, r, theta


if __name__ == "__main__":
    # small, module-consistent shapes; N deliberately not a multiple of 8 and G not a
    # multiple of 128 so the ragged batch block and the gene-lane padding are exercised.
    N, D, G, C, R = 20, 16, 250, 4, 8      # batch, n_input, n_output, n_cell_types, n_rbf
    rbf_sigma = TWO_PI / R * 0.5

    key = jax.random.PRNGKey(0)
    ks = jax.random.split(key, 10)
    params = {
        "phase_W": jax.random.normal(ks[0], (D, 1), jnp.float32) * 0.3,
        "phase_b": jnp.zeros((1,), jnp.float32),
        "drug_W": jax.random.normal(ks[1], (D + 1, 1), jnp.float32) * 0.3,
        "drug_b": jnp.zeros((1,), jnp.float32),
        "W_rbf": jax.random.normal(ks[2], (R, G), jnp.float32),
        "W_drug": jax.random.normal(ks[3], (G,), jnp.float32),
        "b_type": jax.random.normal(ks[4], (C, G), jnp.float32),
        "disp_raw": jax.random.normal(ks[5], (C, G), jnp.float32),
        # deterministic cycle-gene mask: every other gene is a cycle gene
        "cycle_mask": (jnp.arange(G) % 2 == 0).astype(jnp.float32),
    }

    z = jax.random.normal(ks[6], (N, D), jnp.float32)
    library = jax.random.normal(ks[7], (N, 1), jnp.float32) * 0.5
    d = ((jnp.arange(N, dtype=jnp.float32) % 3) * 0.5).reshape(N, 1)   # zeros = controls
    t = (jnp.arange(N) % C).astype(jnp.int32)

    ref = _reference_forward(params, z, library, d, t, rbf_sigma)
    names = ("px_scale", "disp", "px_rate", "rbf_activations", "r", "theta")

    # f32 weights: exact path (tight tolerance), with the default tile and a forced small
    # tile (multi-step grid + ragged last block). bf16 weights: perf path — only px_scale
    # / px_rate carry bf16 matmul error (rbf/r/theta are computed in f32 either way).
    runs = [
        (dict(weights_dtype=jnp.float32), 5e-3, 1e-5),
        (dict(weights_dtype=jnp.float32, block_n=8), 5e-3, 1e-5),
        (dict(weights_dtype=jnp.bfloat16), 5e-2, 1e-3),
    ]
    for kwargs, scale_rtol, scale_atol in runs:
        out = decoder_ccvi_forward(params, z, library, d, t, rbf_sigma=rbf_sigma, **kwargs)
        out = jax.block_until_ready(out)
        px_scale, disp, px_rate, _none, rbf_act, r, theta = out[:7]
        got_all = (px_scale, disp, px_rate, rbf_act, r, theta)
        for name, got, want in zip(names, got_all, ref):
            assert got.shape == want.shape, (name, got.shape, want.shape)
            if name in ("px_scale", "px_rate"):
                rtol, atol = scale_rtol, scale_atol
            else:
                rtol, atol = 5e-3, 1e-5
            assert jnp.allclose(got, want, rtol=rtol, atol=atol), \
                f"mismatch vs reference: {name} ({kwargs})"

    print("KERNEL_OK")
</pallas_src>

<mosaic_0001>
module attributes {stable_mosaic.version = 11 : i64} {
  func.func @_decoder_ccvi_kernel(%arg0: i32, %arg1: memref<16x17xf32, #tpu.memory_space<vmem>>, %arg2: memref<16x4xf32, #tpu.memory_space<vmem>>, %arg3: memref<17x2xf32, #tpu.memory_space<vmem>>, %arg4: memref<2xf32, #tpu.memory_space<smem>>, %arg5: memref<1x8xf32, #tpu.memory_space<vmem>>, %arg6: memref<13x256xf32, #tpu.memory_space<vmem>>, %arg7: memref<16x256xf32, #tpu.memory_space<vmem>>, %arg8: memref<16x128xf32, #tpu.memory_space<vmem>>) attributes {dimension_semantics = [#tpu.dimension_semantics<parallel>], iteration_bounds = array<i64: 2>, scalar_prefetch = 0 : i64, scratch_operands = 0 : i64, tpu.core_type = #tpu.core_type<tc>, window_params = [{transform_indices = @transform_0, window_bounds = array<i64: 16, 17>}, {transform_indices = @transform_1, window_bounds = array<i64: 16, 4>}, {pipeline_mode = #tpu.pipeline_mode<synchronous>, transform_indices = @transform_2, window_bounds = array<i64: 17, 2>}, {transform_indices = @transform_3, window_bounds = array<i64: 2>}, {pipeline_mode = #tpu.pipeline_mode<synchronous>, transform_indices = @transform_4, window_bounds = array<i64: 1, 8>}, {pipeline_mode = #tpu.pipeline_mode<synchronous>, transform_indices = @transform_5, window_bounds = array<i64: 13, 256>}, {transform_indices = @transform_6, window_bounds = array<i64: 16, 256>}, {transform_indices = @transform_7, window_bounds = array<i64: 16, 128>}]} {
    %c0 = arith.constant 0 : index
    %c0_0 = arith.constant 0 : index
    %0 = vector.load %arg1[%c0, %c0_0] : memref<16x17xf32, #tpu.memory_space<vmem>>, vector<16x17xf32>
    %c0_1 = arith.constant 0 : index
    %c0_2 = arith.constant 0 : index
    %1 = vector.load %arg2[%c0_1, %c0_2] : memref<16x4xf32, #tpu.memory_space<vmem>>, vector<16x4xf32>
    %2 = vector.extract_strided_slice %0 {offsets = [0, 16], sizes = [16, 1], strides = [1, 1]} : vector<16x17xf32> to vector<16x1xf32>
    %c0_3 = arith.constant 0 : index
    %3 = memref.load %arg4[%c0_3] : memref<2xf32, #tpu.memory_space<smem>>
    %c1 = arith.constant 1 : index
    %4 = memref.load %arg4[%c1] : memref<2xf32, #tpu.memory_space<smem>>
    %c0_4 = arith.constant 0 : index
    %c0_5 = arith.constant 0 : index
    %5 = vector.load %arg3[%c0_4, %c0_5] : memref<17x2xf32, #tpu.memory_space<vmem>>, vector<17x2xf32>
    %cst = arith.constant dense<0.000000e+00> : vector<16x2xf32>
    %6 = tpu.matmul %0, %5, %cst {dimension_numbers = #tpu.dot_dimension_numbers<[1], [0], [0], [1], [0, 0, 1, 1], [], []>, precision = #tpu.contract_precision<fp32>} : vector<16x17xf32>, vector<17x2xf32>, vector<16x2xf32> -> vector<16x2xf32>
    %7 = vector.extract_strided_slice %6 {offsets = [0, 0], sizes = [16, 1], strides = [1, 1]} : vector<16x2xf32> to vector<16x1xf32>
    %8 = vector.broadcast %3 : f32 to vector<16x1xf32>
    %9 = arith.addf %7, %8 : vector<16x1xf32>
    %cst_6 = arith.constant 0.000000e+00 : f32
    %10 = vector.broadcast %cst_6 : f32 to vector<16x1xf32>
    %11 = arith.maximumf %9, %10 : vector<16x1xf32>
    %12 = arith.negf %11 : vector<16x1xf32>
    %13 = math.exp %12 : vector<16x1xf32>
    %cst_7 = arith.constant 1.000000e+00 : f32
    %14 = vector.broadcast %cst_7 : f32 to vector<16x1xf32>
    %15 = arith.addf %14, %13 : vector<16x1xf32>
    %16 = arith.divf %14, %15 : vector<16x1xf32>
    %cst_8 = arith.constant 6.28318548 : f32
    %17 = vector.broadcast %cst_8 : f32 to vector<16x1xf32>
    %18 = arith.mulf %16, %17 : vector<16x1xf32>
    %c0_9 = arith.constant 0 : index
    %c0_10 = arith.constant 0 : index
    %19 = vector.load %arg5[%c0_9, %c0_10] : memref<1x8xf32, #tpu.memory_space<vmem>>, vector<1x8xf32>
    %20 = vector.broadcast %18 : vector<16x1xf32> to vector<16x8xf32>
    %21 = vector.broadcast %19 : vector<1x8xf32> to vector<16x8xf32>
    %22 = arith.subf %20, %21 : vector<16x8xf32>
    %23 = math.absf %22 : vector<16x8xf32>
    %cst_11 = arith.constant 6.28318548 : f32
    %24 = vector.broadcast %cst_11 : f32 to vector<16x8xf32>
    %25 = arith.subf %24, %23 : vector<16x8xf32>
    %26 = arith.minimumf %23, %25 : vector<16x8xf32>
    %cst_12 = arith.constant -3.24227786 : f32
    %27 = vector.broadcast %cst_12 : f32 to vector<16x8xf32>
    %28 = arith.mulf %27, %26 : vector<16x8xf32>
    %29 = arith.mulf %28, %26 : vector<16x8xf32>
    %30 = math.exp %29 : vector<16x8xf32>
    %31 = vector.extract_strided_slice %6 {offsets = [0, 1], sizes = [16, 1], strides = [1, 1]} : vector<16x2xf32> to vector<16x1xf32>
    %32 = vector.broadcast %4 : f32 to vector<16x1xf32>
    %33 = arith.addf %31, %32 : vector<16x1xf32>
    %cst_13 = arith.constant 0.000000e+00 : f32
    %34 = vector.broadcast %cst_13 : f32 to vector<16x1xf32>
    %35 = arith.maximumf %33, %34 : vector<16x1xf32>
    %cst_14 = arith.constant 0.000000e+00 : f32
    %36 = vector.broadcast %cst_14 : f32 to vector<16x1xf32>
    %37 = arith.maximumf %35, %36 : vector<16x1xf32>
    %38 = vector.broadcast %cst_14 : f32 to vector<16x1xf32>
    %39 = arith.subf %35, %38 : vector<16x1xf32>
    %40 = arith.cmpf one, %39, %39 : vector<16x1xf32>
    %41 = vector.broadcast %cst_14 : f32 to vector<16x1xf32>
    %42 = arith.addf %35, %41 : vector<16x1xf32>
    %43 = math.absf %39 : vector<16x1xf32>
    %cst_15 = arith.constant 0.000000e+00 : f32
    %44 = vector.broadcast %cst_15 : f32 to vector<16x1xf32>
    %45 = arith.subf %44, %43 : vector<16x1xf32>
    %46 = math.exp %45 : vector<16x1xf32>
    %47 = math.log1p %46 : vector<16x1xf32>
    %48 = arith.addf %37, %47 : vector<16x1xf32>
    %49 = arith.select %40, %42, %48 : vector<16x1xi1>, vector<16x1xf32>
    %cst_16 = arith.constant 0.000000e+00 : f32
    %50 = vector.broadcast %cst_16 : f32 to vector<16x1xf32>
    %51 = arith.cmpf oeq, %2, %50 : vector<16x1xf32>
    %cst_17 = arith.constant 0.000000e+00 : f32
    %52 = vector.broadcast %cst_17 : f32 to vector<16x1xf32>
    %53 = arith.select %51, %52, %49 : vector<16x1xi1>, vector<16x1xf32>
    %54 = tpu.concatenate %30, %1, %53 in 1 : vector<16x8xf32>, vector<16x4xf32>, vector<16x1xf32> -> vector<16x13xf32>
    %c0_18 = arith.constant 0 : index
    %c0_19 = arith.constant 0 : index
    %55 = vector.load %arg6[%c0_18, %c0_19] : memref<13x256xf32, #tpu.memory_space<vmem>>, vector<13x256xf32>
    %cst_20 = arith.constant dense<0.000000e+00> : vector<16x256xf32>
    %56 = tpu.matmul %54, %55, %cst_20 {dimension_numbers = #tpu.dot_dimension_numbers<[1], [0], [0], [1], [0, 0, 1, 1], [], []>, precision = #tpu.contract_precision<fp32>} : vector<16x13xf32>, vector<13x256xf32>, vector<16x256xf32> -> vector<16x256xf32>
    %cst_21 = arith.constant dense<0xFF800000> : vector<16xf32>
    %57 = vector.multi_reduction <maximumf>, %56, %cst_21 [1] : vector<16x256xf32> to vector<16xf32>
    %58 = vector.shape_cast %57 : vector<16xf32> to vector<16x1xf32>
    %59 = vector.broadcast %58 : vector<16x1xf32> to vector<16x256xf32>
    %60 = arith.subf %56, %59 : vector<16x256xf32>
    %61 = math.exp %60 : vector<16x256xf32>
    %cst_22 = arith.constant dense<0.000000e+00> : vector<16xf32>
    %62 = vector.multi_reduction <add>, %61, %cst_22 [1] : vector<16x256xf32> to vector<16xf32>
    %63 = vector.shape_cast %62 : vector<16xf32> to vector<16x1xf32>
    %64 = tpu.reciprocal %63 {approx = true} : vector<16x1xf32> -> vector<16x1xf32>
    %65 = arith.mulf %63, %64 : vector<16x1xf32>
    %cst_23 = arith.constant 2.000000e+00 : f32
    %66 = vector.broadcast %cst_23 : f32 to vector<16x1xf32>
    %67 = arith.subf %66, %65 : vector<16x1xf32>
    %68 = arith.mulf %64, %67 : vector<16x1xf32>
    %69 = vector.broadcast %68 : vector<16x1xf32> to vector<16x256xf32>
    %70 = arith.mulf %61, %69 : vector<16x256xf32>
    %c0_24 = arith.constant 0 : index
    %c0_25 = arith.constant 0 : index
    %71 = vector.load %arg7[%c0_24, %c0_25] : memref<16x256xf32, #tpu.memory_space<vmem>>, vector<16x256xf32>
    tpu.vector_store %arg7[%c0_24, %c0_25], %70 {strides = array<i32>} : memref<16x256xf32, #tpu.memory_space<vmem>>, vector<16x256xf32>,
    %cst_26 = arith.constant 0.000000e+00 : f32
    %72 = vector.broadcast %cst_26 : f32 to vector<16x118xf32>
    %73 = tpu.concatenate %30, %53, %18, %72 in 1 : vector<16x8xf32>, vector<16x1xf32>, vector<16x1xf32>, vector<16x118xf32> -> vector<16x128xf32>
    %c0_27 = arith.constant 0 : index
    %c0_28 = arith.constant 0 : index
    %74 = vector.load %arg8[%c0_27, %c0_28] : memref<16x128xf32, #tpu.memory_space<vmem>>, vector<16x128xf32>
    tpu.vector_store %arg8[%c0_27, %c0_28], %73 {strides = array<i32>} : memref<16x128xf32, #tpu.memory_space<vmem>>, vector<16x128xf32>,
    return
  }
  func.func @transform_0(%arg0: i32) -> (i32, i32) {
    %c0_i32 = arith.constant 0 : i32
    %c0_i32_0 = arith.constant 0 : i32
    return %arg0, %c0_i32 : i32, i32
  }
  func.func @transform_1(%arg0: i32) -> (i32, i32) {
    %c0_i32 = arith.constant 0 : i32
    %c0_i32_0 = arith.constant 0 : i32
    return %arg0, %c0_i32 : i32, i32
  }
  func.func @transform_2(%arg0: i32) -> (i32, i32) {
    %c0_i32 = arith.constant 0 : i32
    %c0_i32_0 = arith.constant 0 : i32
    %c0_i32_1 = arith.constant 0 : i32
    return %c0_i32, %c0_i32_0 : i32, i32
  }
  func.func @transform_3(%arg0: i32) -> i32 {
    %c0_i32 = arith.constant 0 : i32
    %c0_i32_0 = arith.constant 0 : i32
    return %c0_i32 : i32
  }
  func.func @transform_4(%arg0: i32) -> (i32, i32) {
    %c0_i32 = arith.constant 0 : i32
    %c0_i32_0 = arith.constant 0 : i32
    %c0_i32_1 = arith.constant 0 : i32
    return %c0_i32, %c0_i32_0 : i32, i32
  }
  func.func @transform_5(%arg0: i32) -> (i32, i32) {
    %c0_i32 = arith.constant 0 : i32
    %c0_i32_0 = arith.constant 0 : i32
    %c0_i32_1 = arith.constant 0 : i32
    return %c0_i32, %c0_i32_0 : i32, i32
  }
  func.func @transform_6(%arg0: i32) -> (i32, i32) {
    %c0_i32 = arith.constant 0 : i32
    %c0_i32_0 = arith.constant 0 : i32
    return %arg0, %c0_i32 : i32, i32
  }
  func.func @transform_7(%arg0: i32) -> (i32, i32) {
    %c0_i32 = arith.constant 0 : i32
    %c0_i32_0 = arith.constant 0 : i32
    return %arg0, %c0_i32 : i32, i32
  }
}

</mosaic_0001>

<llo_original>
// kernel: tpu_custom_call.1
$region0: #{tpu_custom_call.1}
  #allocation0 [shape = 'u32[]', space=smem, size = 0x4, offset = 0x4, fixed_abs, tag = 'smem constant byte address 0x4 - core index']
  #allocation1 [shape = 'u32[72,128]{1,0:T(1,128)}', space=vmem, size = 0x9000, scoped, tag = 'internal scratch']
  %s0 = inlined_call_operand.hbm [shape: f32[20,17], index: 0, kind: input, shape index: {}]
  %s1 = inlined_call_operand.vmem [shape: f32[20,4], index: 1, kind: input, shape index: {}]
  %s2 = inlined_call_operand.vmem [shape: f32[17,2], index: 2, kind: input, shape index: {}]
  %s3 = inlined_call_operand.vmem [shape: f32[2], index: 3, kind: input, shape index: {}]
  %s4 = inlined_call_operand.vmem [shape: f32[1,8], index: 4, kind: input, shape index: {}]
  %s5 = inlined_call_operand.vmem [shape: f32[13,256], index: 5, kind: input, shape index: {}]
  %s6 = inlined_call_operand.hbm [shape: f32[20,256], index: 6, kind: output, shape index: {0}]
  %s7 = inlined_call_operand.hbm [shape: f32[20,128], index: 7, kind: output, shape index: {1}]
  %8 = xla_tuple %s6, %s7
  %s9 = sld [smem:[#allocation0]]
  $region73: #{tpu_custom_call.1} parent=0
    _
  %s11 = ssub.s32 1, %s9
  %s12 = scalar_select 0, %s11, %s9
  $region1: #{tpu_custom_call.1} parent=0
    #allocation2 [shape = 'u8[16384]{0}', space=vmem, size = 0x4000, scoped, tag = 'input window, operand 0']
    #allocation3 [shape = 's32[2]{0}', space=sflag, size = 0x8, scoped, tag = 'scoped memory for tpu_custom_call.1']
    #allocation4 [shape = 's32[2]{0}', space=sflag, size = 0x8, scoped, tag = 'scoped memory for tpu_custom_call.1']
    #allocation5 [shape = 's32[2]{0}', space=sflag, size = 0x8, scoped, tag = 'scoped memory for tpu_custom_call.1']
    #allocation6 [shape = 'u8[512]{0}', space=smem, size = 0x200, scoped, tag = 'input window, operand 3, single buffered']
    #allocation7 [shape = 'u8[32768]{0}', space=vmem, size = 0x8000, scoped, tag = 'output window, operand 0']
    #allocation8 [shape = 'u8[16384]{0}', space=vmem, size = 0x4000, scoped, tag = 'output window, operand 1']
    #allocation9 [shape = 's32[2]{0}', space=sflag, size = 0x8, scoped, tag = 'scoped memory for tpu_custom_call.1']
    %13 = vsyncpa [#allocation3], 0
    %s14 = scalar_lea.sflag [#allocation3], 1
    %15 = vsyncpa %s14, 0
    %16 = vsyncpa [#allocation5], 0
    %17 = vsyncpa [#allocation4], 0
    %s18 = scalar_lea.sflag [#allocation4], 1
    %19 = vsyncpa %s18, 0
    %20 = vsyncpa [#allocation9], 0
    %s21 = scalar_lea.sflag [#allocation9], 1
    %22 = vsyncpa %s21, 0
    loop: start=0, step=1, limit=4
    $region2: #{tpu_custom_call.1} parent=1 // loop_pre_header
      _
    $region3: #{tpu_custom_call.1} parent=1 // loop_header
      %s24 = sphi 0, %s28
      %p25 = scmp.ge.s32.totalorder %s24, 4
      %s34 = sphi 0, %s36
      %s37 = sphi 0, %s34
      %s38 = sphi 0, %s37
      %s54 = sphi 0, %s38
      %s60 = sphi 0, %s62
      %s63 = sphi 0, %s60
      %s64 = sphi 0, %s63
      %s80 = sphi 0, %s64
      %s84 = sphi 0, %s84
      %s86 = sphi 0, %s84
      %s87 = sphi 0, %s86
      %s101 = sphi 0, %s87
      %s105 = sphi 0, %s105
      %s107 = sphi 0, %s105
      %s108 = sphi 0, %s107
      %s122 = sphi 0, %s108
      %s126 = sphi 0, %s126
      %s128 = sphi 0, %s126
      %s129 = sphi 0, %s128
      %s143 = sphi 0, %s129
      %s147 = sphi 0, %s147
      %s149 = sphi 0, %s147
      %s150 = sphi 0, %s149
      %s164 = sphi 0, %s150
      %s170 = sphi 0, %s172
      %s173 = sphi 0, %s170
      %s174 = sphi 0, %s173
      %s190 = sphi 0, %s174
      %s196 = sphi 0, %s198
      %s199 = sphi 0, %s196
      %s200 = sphi 0, %s199
      %s216 = sphi 0, %s200
    $region4: #{tpu_custom_call.1} parent=1 // loop_header_branch
      %27 = sbr.rel (%p25) target = $region8
    $region5: #{tpu_custom_call.1} parent=1 // loop_body
      %s29 = ssub.s32 %s24, 1
      %s30 = ssub.s32 %s24, 2
      %s31 = sadd.s32 %s24, 1
      %s32 = ssub.s32 %s24, %s31
      %p33 = scmp.eq.s32.totalorder %s32, 0
      %s35 = sadd.s32 %s34, 1
      %s36 = scalar_select %p33, %s34, %s35
      %p39 = pneg %p33
      %p40 = scmp.eq.s32.totalorder %s24, 1
      %p41 = por %p39, %p40
      %p42 = scmp.ne.s32.totalorder %s34, %s37
      %p43 = scmp.eq.s32.totalorder %s24, 0
      %p44 = por %p42, %p43
      %p45 = scmp.ne.s32.totalorder %s34, %s37
      %p46 = scmp.eq.s32.totalorder %s29, 1
      %p47 = por %p45, %p46
      %p48 = scmp.ne.s32.totalorder %s37, %s38
      %p49 = scmp.eq.s32.totalorder %s29, 0
      %p50 = por %p48, %p49
      %p51 = scmp.ne.s32.totalorder %s37, %s38
      %p52 = scmp.eq.s32.totalorder %s30, 1
      %p53 = por %p51, %p52
      %p55 = scmp.ne.s32.totalorder %s38, %s54
      %p56 = scmp.eq.s32.totalorder %s30, 0
      %p57 = por %p55, %p56
      %s58 = ssub.s32 %s24, %s31
      %p59 = scmp.eq.s32.totalorder %s58, 0
      %s61 = sadd.s32 %s60, 1
      %s62 = scalar_select %p59, %s60, %s61
      %p65 = pneg %p59
      %p66 = scmp.eq.s32.totalorder %s24, 1
      %p67 = por %p65, %p66
      %p68 = scmp.ne.s32.totalorder %s60, %s63
      %p69 = scmp.eq.s32.totalorder %s24, 0
      %p70 = por %p68, %p69
      %p71 = scmp.ne.s32.totalorder %s60, %s63
      %p72 = scmp.eq.s32.totalorder %s29, 1
      %p73 = por %p71, %p72
      %p74 = scmp.ne.s32.totalorder %s63, %s64
      %p75 = scmp.eq.s32.totalorder %s29, 0
      %p76 = por %p74, %p75
      %p77 = scmp.ne.s32.totalorder %s63, %s64
      %p78 = scmp.eq.s32.totalorder %s30, 1
      %p79 = por %p77, %p78
      %p81 = scmp.ne.s32.totalorder %s64, %s80
      %p82 = scmp.eq.s32.totalorder %s30, 0
      %p83 = por %p81, %p82
      %s85 = sadd.s32 %s84, 1
      %p88 = scmp.eq.s32.totalorder %s24, 1
      %p89 = scmp.ne.s32.totalorder %s84, %s86
      %p90 = scmp.eq.s32.totalorder %s24, 0
      %p91 = por %p89, %p90
      %p92 = scmp.ne.s32.totalorder %s84, %s86
      %p93 = scmp.eq.s32.totalorder %s29, 1
      %p94 = por %p92, %p93
      %p95 = scmp.ne.s32.totalorder %s86, %s87
      %p96 = scmp.eq.s32.totalorder %s29, 0
      %p97 = por %p95, %p96
      %p98 = scmp.ne.s32.totalorder %s86, %s87
      %p99 = scmp.eq.s32.totalorder %s30, 1
      %p100 = por %p98, %p99
      %p102 = scmp.ne.s32.totalorder %s87, %s101
      %p103 = scmp.eq.s32.totalorder %s30, 0
      %p104 = por %p102, %p103
      %s106 = sadd.s32 %s105, 1
      %p109 = scmp.eq.s32.totalorder %s24, 1
      %p110 = scmp.ne.s32.totalorder %s105, %s107
      %p111 = scmp.eq.s32.totalorder %s24, 0
      %p112 = por %p110, %p111
      %p113 = scmp.ne.s32.totalorder %s105, %s107
      %p114 = scmp.eq.s32.totalorder %s29, 1
      %p115 = por %p113, %p114
      %p116 = scmp.ne.s32.totalorder %s107, %s108
      %p117 = scmp.eq.s32.totalorder %s29, 0
      %p118 = por %p116, %p117
      %p119 = scmp.ne.s32.totalorder %s107, %s108
      %p120 = scmp.eq.s32.totalorder %s30, 1
      %p121 = por %p119, %p120
      %p123 = scmp.ne.s32.totalorder %s108, %s122
      %p124 = scmp.eq.s32.totalorder %s30, 0
      %p125 = por %p123, %p124
      %s127 = sadd.s32 %s126, 1
      %p130 = scmp.eq.s32.totalorder %s24, 1
      %p131 = scmp.ne.s32.totalorder %s126, %s128
      %p132 = scmp.eq.s32.totalorder %s24, 0
      %p133 = por %p131, %p132
      %p134 = scmp.ne.s32.totalorder %s126, %s128
      %p135 = scmp.eq.s32.totalorder %s29, 1
      %p136 = por %p134, %p135
      %p137 = scmp.ne.s32.totalorder %s128, %s129
      %p138 = scmp.eq.s32.totalorder %s29, 0
      %p139 = por %p137, %p138
      %p140 = scmp.ne.s32.totalorder %s128, %s129
      %p141 = scmp.eq.s32.totalorder %s30, 1
      %p142 = por %p140, %p141
      %p144 = scmp.ne.s32.totalorder %s129, %s143
      %p145 = scmp.eq.s32.totalorder %s30, 0
      %p146 = por %p144, %p145
      %s148 = sadd.s32 %s147, 1
      %p151 = scmp.eq.s32.totalorder %s24, 1
      %p152 = scmp.ne.s32.totalorder %s147, %s149
      %p153 = scmp.eq.s32.totalorder %s24, 0
      %p154 = por %p152, %p153
      %p155 = scmp.ne.s32.totalorder %s147, %s149
      %p156 = scmp.eq.s32.totalorder %s29, 1
      %p157 = por %p155, %p156
      %p158 = scmp.ne.s32.totalorder %s149, %s150
      %p159 = scmp.eq.s32.totalorder %s29, 0
      %p160 = por %p158, %p159
      %p161 = scmp.ne.s32.totalorder %s149, %s150
      %p162 = scmp.eq.s32.totalorder %s30, 1
      %p163 = por %p161, %p162
      %p165 = scmp.ne.s32.totalorder %s150, %s164
      %p166 = scmp.eq.s32.totalorder %s30, 0
      %p167 = por %p165, %p166
      %s168 = ssub.s32 %s24, %s31
      %p169 = scmp.eq.s32.totalorder %s168, 0
      %s171 = sadd.s32 %s170, 1
      %s172 = scalar_select %p169, %s170, %s171
      %p175 = pneg %p169
      %p176 = scmp.eq.s32.totalorder %s24, 1
      %p177 = por %p175, %p176
      %p178 = scmp.ne.s32.totalorder %s170, %s173
      %p179 = scmp.eq.s32.totalorder %s24, 0
      %p180 = por %p178, %p179
      %p181 = scmp.ne.s32.totalorder %s170, %s173
      %p182 = scmp.eq.s32.totalorder %s29, 1
      %p183 = por %p181, %p182
      %p184 = scmp.ne.s32.totalorder %s173, %s174
      %p185 = scmp.eq.s32.totalorder %s29, 0
      %p186 = por %p184, %p185
      %p187 = scmp.ne.s32.totalorder %s173, %s174
      %p188 = scmp.eq.s32.totalorder %s30, 1
      %p189 = por %p187, %p188
      %p191 = scmp.ne.s32.totalorder %s174, %s190
      %p192 = scmp.eq.s32.totalorder %s30, 0
      %p193 = por %p191, %p192
      %s194 = ssub.s32 %s24, %s31
      %p195 = scmp.eq.s32.totalorder %s194, 0
      %s197 = sadd.s32 %s196, 1
      %s198 = scalar_select %p195, %s196, %s197
      %p201 = pneg %p195
      %p202 = scmp.eq.s32.totalorder %s24, 1
      %p203 = por %p201, %p202
      %p204 = scmp.ne.s32.totalorder %s196, %s199
      %p205 = scmp.eq.s32.totalorder %s24, 0
      %p206 = por %p204, %p205
      %p207 = scmp.ne.s32.totalorder %s196, %s199
      %p208 = scmp.eq.s32.totalorder %s29, 1
      %p209 = por %p207, %p208
      %p210 = scmp.ne.s32.totalorder %s199, %s200
      %p211 = scmp.eq.s32.totalorder %s29, 0
      %p212 = por %p210, %p211
      %p213 = scmp.ne.s32.totalorder %s199, %s200
      %p214 = scmp.eq.s32.totalorder %s30, 1
      %p215 = por %p213, %p214
      %p217 = scmp.ne.s32.totalorder %s200, %s216
      %p218 = scmp.eq.s32.totalorder %s30, 0
      %p219 = por %p217, %p218
      %p220 = scmp.le.s32.totalorder 1, %s24
      %p221 = scmp.lt.s32.totalorder %s24, 3
      %p222 = pnand %p220, %p221
      %p223 = pneg %p222
      // Predicated region
      $region9: #{tpu_custom_call.1} parent=5 // pred_check
        _
      $region10: #{tpu_custom_call.1} parent=5 // pred_check_branch
        %225 = sbr.rel (%p222) target = $region12
      $region11: #{tpu_custom_call.1} parent=5 // pred_region
        %s226 = ssub.s32 %s24, 1
        // Predicated region
        $region13: #{tpu_custom_call.1} parent=11 // pred_check
          %p227 = pneg %p97
        $region14: #{tpu_custom_call.1} parent=11 // pred_check_branch
          %229 = sbr.rel (%p227) target = $region16
        $region15: #{tpu_custom_call.1} parent=11 // pred_region
          _
        $region16: #{tpu_custom_call.1} parent=11 // pred_fallthru
          _
        // Predicated region
        $region17: #{tpu_custom_call.1} parent=11 // pred_check
          %p230 = pneg %p118
        $region18: #{tpu_custom_call.1} parent=11 // pred_check_branch
          %232 = sbr.rel (%p230) target = $region20
        $region19: #{tpu_custom_call.1} parent=11 // pred_region
          %234 = vsyncadd [#allocation5], 0
          %s236 = sshll.u32 %s3, 4
          %s237 = int_to_ptr.vmem [resolvable:$true] %s236
          %239 = dma.vmem_to_smem %s237, 16, [#allocation6], [#allocation5]
        $region20: #{tpu_custom_call.1} parent=11 // pred_fallthru
          _
        // Predicated region
        $region21: #{tpu_custom_call.1} parent=11 // pred_check
          %p240 = pneg %p139
        $region22: #{tpu_custom_call.1} parent=11 // pred_check_branch
          %242 = sbr.rel (%p240) target = $region24
        $region23: #{tpu_custom_call.1} parent=11 // pred_region
          _
        $region24: #{tpu_custom_call.1} parent=11 // pred_fallthru
          _
        // Predicated region
        $region25: #{tpu_custom_call.1} parent=11 // pred_check
          %p243 = pneg %p160
        $region26: #{tpu_custom_call.1} parent=11 // pred_check_branch
          %245 = sbr.rel (%p243) target = $region28
        $region27: #{tpu_custom_call.1} parent=11 // pred_region
          _
        $region28: #{tpu_custom_call.1} parent=11 // pred_fallthru
          _
      $region12: #{tpu_custom_call.1} parent=5 // pred_fallthru
        _
      %p246 = scmp.lt.s32.totalorder %s24, 2
      // Predicated region
      $region29: #{tpu_custom_call.1} parent=5 // pred_check
        %p247 = pneg %p246
      $region30: #{tpu_custom_call.1} parent=5 // pred_check_branch
        %249 = sbr.rel (%p247) target = $region32
      $region31: #{tpu_custom_call.1} parent=5 // pred_region
        // Predicated region
        $region33: #{tpu_custom_call.1} parent=31 // pred_check
          %p250 = pneg %p44
        $region34: #{tpu_custom_call.1} parent=31 // pred_check_branch
          %252 = sbr.rel (%p250) target = $region36
        $region35: #{tpu_custom_call.1} parent=31 // pred_region
          %s253 = sand.u32 %s34, 1
          %s254 = scalar_lea.sflag [#allocation3], %s253
          %s255 = sand.u32 %s34, 1
          %s256 = smul.addr %s255, 16
          %s257 = scalar_lea.vmem [#allocation2], %s256
          %s258 = smul.u32 2, %s24
          %s259 = ssub.s32 3, %s258
          %p260 = scmp.lt.s32.totalorder %s259, 2
          %s261 = scalar_select %p260, %s259, 2
          %s262 = smul.u32 8, %s261
          %s263 = ssub.s32 16, %s262
          %s264 = sshll.u32 %s263, 4
          %265 = vsyncadd %s254, %s264
          %p266 = scmp.ne.s32.totalorder 0, %s262
          %s267 = smul.addr %s258, 8
          %s268 = scalar_lea.hbm %s0, %s267
          %s269 = smul.u32 8, %s261
          %s270 = sshll.u32 %s268, 4
          %s271 = int_to_ptr.hbm [resolvable:$true] %s270
          %s272 = sshll.u32 %s257, 4
          %s273 = int_to_ptr.vmem [resolvable:$true] %s272
          %s274 = sshll.u32 %s269, 4
          %278 = dma.hbm_to_vmem [thread:$0]  (%p266), %s271, %s274, %s273, %s254, 128, 128, 8
        $region36: #{tpu_custom_call.1} parent=31 // pred_fallthru
          _
        // Predicated region
        $region37: #{tpu_custom_call.1} parent=31 // pred_check
          %p279 = pneg %p70
        $region38: #{tpu_custom_call.1} parent=31 // pred_check_branch
          %281 = sbr.rel (%p279) target = $region40
        $region39: #{tpu_custom_call.1} parent=31 // pred_region
          %s282 = smul.u32 2, %s24
          %s283 = ssub.s32 3, %s282
          %p284 = scmp.lt.s32.totalorder %s283, 2
          %s285 = scalar_select %p284, %s283, 2
          %s286 = smul.u32 8, %s285
          %p287 = scmp.lt.s32.totalorder %s282, 2
          %s288 = scalar_select %p287, %s282, 2
          %s289 = smul.addr %s288, 8
          %s290 = scalar_lea.vmem %s1, %s289
          %s291 = smul.u32 2, %s24
          %s292 = ssub.s32 3, %s291
          %p293 = scmp.lt.s32.totalorder %s292, 2
          %s294 = scalar_select %p293, %s292, 2
          %s295 = smul.u32 8, %s294
        $region40: #{tpu_custom_call.1} parent=31 // pred_fallthru
          _
      $region32: #{tpu_custom_call.1} parent=5 // pred_fallthru
        _
      %p296 = scmp.le.s32.totalorder 1, %s24
      %p297 = scmp.lt.s32.totalorder %s24, 3
      %p298 = pnand %p296, %p297
      %p299 = pneg %p298
      // Predicated region
      $region41: #{tpu_custom_call.1} parent=5 // pred_check
        _
      $region42: #{tpu_custom_call.1} parent=5 // pred_check_branch
        %301 = sbr.rel (%p298) target = $region44
      $region43: #{tpu_custom_call.1} parent=5 // pred_region
        %s302 = ssub.s32 %s24, 1
        %s303 = sand.u32 %s37, 1
        %s304 = scalar_lea.sflag [#allocation3], %s303
        %s305 = sand.u32 %s37, 1
        %s306 = smul.addr %s305, 16
        %s307 = scalar_lea.vmem [#allocation2], %s306
        // Predicated region
        $region45: #{tpu_custom_call.1} parent=43 // pred_check
          %p308 = pneg %p50
        $region46: #{tpu_custom_call.1} parent=43 // pred_check_branch
          %310 = sbr.rel (%p308) target = $region48
        $region47: #{tpu_custom_call.1} parent=43 // pred_region
          %312 = dma.done %s304, 256
        $region48: #{tpu_custom_call.1} parent=43 // pred_fallthru
          _
        // Predicated region
        $region49: #{tpu_custom_call.1} parent=43 // pred_check
          %p313 = pneg %p118
        $region50: #{tpu_custom_call.1} parent=43 // pred_check_branch
          %315 = sbr.rel (%p313) target = $region52
        $region51: #{tpu_custom_call.1} parent=43 // pred_region
          %317 = dma.done [#allocation5], 16
        $region52: #{tpu_custom_call.1} parent=43 // pred_fallthru
          _
        %318 = sfence
        %s319 = sand.u32 %s37, 1
        %s320 = scalar_lea.sflag [#allocation3], %s319
        %s321 = sand.u32 %s37, 1
        %s322 = smul.addr %s321, 16
        %s323 = scalar_lea.vmem [#allocation2], %s322
        %p324 = pneg %p50
        %p325 = pneg %p47
        %s326 = smul.u32 2, %s29
        %s327 = ssub.s32 3, %s326
        %p328 = scmp.lt.s32.totalorder %s327, 2
        %s329 = scalar_select %p328, %s327, 2
        %s330 = smul.u32 8, %s329
        %p331 = scmp.lt.s32.totalorder %s326, 2
        %s332 = scalar_select %p331, %s326, 2
        %s333 = smul.addr %s332, 8
        %s334 = scalar_lea.vmem %s1, %s333
        %p335 = pneg %p76
        %p336 = pneg %p73
        %p337 = pneg %p97
        %p338 = pneg %p94
        %p339 = pneg %p118
        %p340 = pneg %p115
        %p341 = pneg %p139
        %p342 = pneg %p136
        %p343 = pneg %p160
        %p344 = pneg %p157
        %p345 = pneg %p186
        %p346 = pneg %p183
        %s347 = sand.u32 %s173, 1
        %s348 = scalar_lea.sflag [#allocation4], %s347
        %s349 = sand.u32 %s173, 1
        %s350 = smul.addr %s349, 32
        %s351 = scalar_lea.vmem [#allocation7], %s350
        %p352 = pneg %p212
        %p353 = pneg %p209
        %s354 = sand.u32 %s199, 1
        %s355 = scalar_lea.sflag [#allocation9], %s354
        %s356 = sand.u32 %s199, 1
        %s357 = smul.addr %s356, 16
        %s358 = scalar_lea.vmem [#allocation8], %s357
        %s359 = smul.u32 2, %s29
        %s360 = ssub.s32 3, %s359
        %p361 = scmp.lt.s32.totalorder %s360, 2
        %s362 = scalar_select %p361, %s360, 2
        %s363 = smul.u32 8, %s362
        %s364 = smul.u32 2, %s29
        %s365 = ssub.s32 3, %s364
        %p366 = scmp.lt.s32.totalorder %s365, 2
        %s367 = scalar_select %p366, %s365, 2
        %s368 = smul.u32 8, %s367
        %p369 = scmp.lt.s32.totalorder %s364, 2
        %s370 = scalar_select %p369, %s364, 2
        %s371 = smul.addr %s370, 8
        %s372 = scalar_lea.vmem %s1, %s371
        %s373 = smul.u32 2, %s29
        %s374 = ssub.s32 3, %s373
        %p375 = scmp.lt.s32.totalorder %s374, 2
        %s376 = scalar_select %p375, %s374, 2
        %s377 = smul.u32 8, %s376
        %s378 = smul.u32 2, %s29
        %s379 = ssub.s32 3, %s378
        %p380 = scmp.lt.s32.totalorder %s379, 2
        %s381 = scalar_select %p380, %s379, 2
        %s382 = smul.u32 8, %s381
        %s383 = smul.u32 %s382, 2
        %s384 = smul.u32 2, %s29
        %s385 = ssub.s32 3, %s384
        %p386 = scmp.lt.s32.totalorder %s385, 2
        %s387 = scalar_select %p386, %s385, 2
        %s388 = smul.u32 8, %s387
        %v389 = vld [vmem:[%s307] sm:$0xff]
        %v390 = vld [vmem:[%s307 + $0x8] sm:$0xff]
        %v391 = vld [vmem:[%s372] sm:$0xff]
        %v392 = vld [vmem:[%s372 + $0x8] sm:$0xff]
        %s393 = sld [smem:[#allocation6]]
        %s394 = sld [smem:[#allocation6 + $0x1]]
        %v395 = vld [vmem:[%s2] sm:$0xff]
        %v396 = vld [vmem:[%s2 + $0x8] sm:$0xff]
        %v397 = vld [vmem:[%s2 + $0x10] sm:$0x1]
        %vm398 = vcmask 138240
        %v400 = vsel %vm398, %v389, 0
        %v403 = vsel %vm398, %v390, 0
        %vm405 = vcmask 1040384
        %v407 = vsel %vm405, %v397, 0
        %409 = vmatpush.msra.mxu0 0.0
        %410 = vmatpush.msra.mxu0 0.0
        %411 = vmatpush.msra.mxu0 0.0
        %412 = vmatpush.msra.mxu0 0.0
        %413 = vmatpush.msra.mxu0 0.0
        %414 = vmatpush.msra.mxu0 0.0
        %415 = vmatpush.msra.mxu0 0.0
        %416 = vmatpush.msra.mxu0 0.0
        %417 = vmatpush.msra.mxu0 0.0
        %418 = vmatpush.msra.mxu0 0.0
        %419 = vmatpush.msra.mxu0 0.0
        %420 = vmatpush.msra.mxu0 0.0
        %421 = vmatpush.msra.mxu0 0.0
        %v422 = vand.u32 %v407, 4294901760
        %423 = vmatpush.msra.mxu0 %v422
        %v424 = vand.u32 %v396, 4294901760
        %425 = vmatpush.msra.mxu0 %v424
        %v426 = vand.u32 %v395, 4294901760
        %427 = vmatpush.msra.mxu0 %v426
        %v428 = vand.u32 %v400, 4294901760
        %v429 = vsub.f32 %v400, %v428
        %v430 = vand.u32 %v429, 4294901760
        %v431 = vsub.f32 %v429, %v430
        %v432 = vand.u32 %v431, 4294901760
        %433 = vmatmul.f32.gmra.mxu0 %v432
        %v434 = vpop.f32.mrf.mxu0
        %v435 = vadd.f32 0.0, %v434
        %v436 = vand.u32 %v403, 4294901760
        %v437 = vsub.f32 %v403, %v436
        %v438 = vand.u32 %v437, 4294901760
        %v439 = vsub.f32 %v437, %v438
        %v440 = vand.u32 %v439, 4294901760
        %441 = vmatmul.f32.gmra.mxu0 %v440
        %v442 = vpop.f32.mrf.mxu0
        %v443 = vadd.f32 0.0, %v442
        %444 = vdwg.mxu0
        %445 = vmatpush.msra.mxu0 0.0
        %446 = vmatpush.msra.mxu0 0.0
        %447 = vmatpush.msra.mxu0 0.0
        %448 = vmatpush.msra.mxu0 0.0
        %449 = vmatpush.msra.mxu0 0.0
        %450 = vmatpush.msra.mxu0 0.0
        %451 = vmatpush.msra.mxu0 0.0
        %452 = vmatpush.msra.mxu0 0.0
        %453 = vmatpush.msra.mxu0 0.0
        %454 = vmatpush.msra.mxu0 0.0
        %455 = vmatpush.msra.mxu0 0.0
        %456 = vmatpush.msra.mxu0 0.0
        %457 = vmatpush.msra.mxu0 0.0
        %v458 = vand.u32 %v407, 4294901760
        %v459 = vsub.f32 %v407, %v458
        %v460 = vand.u32 %v459, 4294901760
        %v461 = vsub.f32 %v459, %v460
        %v462 = vand.u32 %v461, 4294901760
        %463 = vmatpush.msra.mxu0 %v462
        %v464 = vand.u32 %v396, 4294901760
        %v465 = vsub.f32 %v396, %v464
        %v466 = vand.u32 %v465, 4294901760
        %v467 = vsub.f32 %v465, %v466
        %v468 = vand.u32 %v467, 4294901760
        %469 = vmatpush.msra.mxu0 %v468
        %v470 = vand.u32 %v395, 4294901760
        %v471 = vsub.f32 %v395, %v470
        %v472 = vand.u32 %v471, 4294901760
        %v473 = vsub.f32 %v471, %v472
        %v474 = vand.u32 %v473, 4294901760
        %475 = vmatpush.msra.mxu0 %v474
        %v476 = vand.u32 %v400, 4294901760
        %477 = vmatmul.f32.gmra.mxu0 %v476
        %v478 = vpop.f32.mrf.mxu0
        %v479 = vadd.f32 %v435, %v478
        %v480 = vand.u32 %v403, 4294901760
        %481 = vmatmul.f32.gmra.mxu0 %v480
        %v482 = vpop.f32.mrf.mxu0
        %v483 = vadd.f32 %v443, %v482
        %484 = vdwg.mxu0
        %485 = vmatpush.msra.mxu0 0.0
        %486 = vmatpush.msra.mxu0 0.0
        %487 = vmatpush.msra.mxu0 0.0
        %488 = vmatpush.msra.mxu0 0.0
        %489 = vmatpush.msra.mxu0 0.0
        %490 = vmatpush.msra.mxu0 0.0
        %491 = vmatpush.msra.mxu0 0.0
        %492 = vmatpush.msra.mxu0 0.0
        %493 = vmatpush.msra.mxu0 0.0
        %494 = vmatpush.msra.mxu0 0.0
        %495 = vmatpush.msra.mxu0 0.0
        %496 = vmatpush.msra.mxu0 0.0
        %497 = vmatpush.msra.mxu0 0.0
        %v498 = vand.u32 %v407, 4294901760
        %v499 = vsub.f32 %v407, %v498
        %500 = vmatpush.msra.mxu0 %v499
        %v501 = vand.u32 %v396, 4294901760
        %v502 = vsub.f32 %v396, %v501
        %503 = vmatpush.msra.mxu0 %v502
        %v504 = vand.u32 %v395, 4294901760
        %v505 = vsub.f32 %v395, %v504
        %506 = vmatpush.msra.mxu0 %v505
        %v507 = vand.u32 %v400, 4294901760
        %v508 = vsub.f32 %v400, %v507
        %509 = vmatmul.f32.gmra.mxu0 %v508
        %v510 = vpop.f32.mrf.mxu0
        %v511 = vadd.f32 %v479, %v510
        %v512 = vand.u32 %v403, 4294901760
        %v513 = vsub.f32 %v403, %v512
        %514 = vmatmul.f32.gmra.mxu0 %v513
        %v515 = vpop.f32.mrf.mxu0
        %v516 = vadd.f32 %v483, %v515
        %517 = vdwg.mxu0
        %518 = vmatpush.msra.mxu0 0.0
        %519 = vmatpush.msra.mxu0 0.0
        %520 = vmatpush.msra.mxu0 0.0
        %521 = vmatpush.msra.mxu0 0.0
        %522 = vmatpush.msra.mxu0 0.0
        %523 = vmatpush.msra.mxu0 0.0
        %524 = vmatpush.msra.mxu0 0.0
        %525 = vmatpush.msra.mxu0 0.0
        %526 = vmatpush.msra.mxu0 0.0
        %527 = vmatpush.msra.mxu0 0.0
        %528 = vmatpush.msra.mxu0 0.0
        %529 = vmatpush.msra.mxu0 0.0
        %530 = vmatpush.msra.mxu0 0.0
        %v531 = vand.u32 %v407, 4294901760
        %532 = vmatpush.msra.mxu0 %v531
        %v533 = vand.u32 %v396, 4294901760
        %534 = vmatpush.msra.mxu0 %v533
        %v535 = vand.u32 %v395, 4294901760
        %536 = vmatpush.msra.mxu0 %v535
        %v537 = vand.u32 %v400, 4294901760
        %v538 = vsub.f32 %v400, %v537
        %v539 = vand.u32 %v538, 4294901760
        %540 = vmatmul.f32.gmra.mxu0 %v539
        %v541 = vpop.f32.mrf.mxu0
        %v542 = vadd.f32 %v511, %v541
        %v543 = vand.u32 %v403, 4294901760
        %v544 = vsub.f32 %v403, %v543
        %v545 = vand.u32 %v544, 4294901760
        %546 = vmatmul.f32.gmra.mxu0 %v545
        %v547 = vpop.f32.mrf.mxu0
        %v548 = vadd.f32 %v516, %v547
        %549 = vdwg.mxu0
        %550 = vmatpush.msra.mxu0 0.0
        %551 = vmatpush.msra.mxu0 0.0
        %552 = vmatpush.msra.mxu0 0.0
        %553 = vmatpush.msra.mxu0 0.0
        %554 = vmatpush.msra.mxu0 0.0
        %555 = vmatpush.msra.mxu0 0.0
        %556 = vmatpush.msra.mxu0 0.0
        %557 = vmatpush.msra.mxu0 0.0
        %558 = vmatpush.msra.mxu0 0.0
        %559 = vmatpush.msra.mxu0 0.0
        %560 = vmatpush.msra.mxu0 0.0
        %561 = vmatpush.msra.mxu0 0.0
        %562 = vmatpush.msra.mxu0 0.0
        %v563 = vand.u32 %v407, 4294901760
        %v564 = vsub.f32 %v407, %v563
        %v565 = vand.u32 %v564, 4294901760
        %566 = vmatpush.msra.mxu0 %v565
        %v567 = vand.u32 %v396, 4294901760
        %v568 = vsub.f32 %v396, %v567
        %v569 = vand.u32 %v568, 4294901760
        %570 = vmatpush.msra.mxu0 %v569
        %v571 = vand.u32 %v395, 4294901760
        %v572 = vsub.f32 %v395, %v571
        %v573 = vand.u32 %v572, 4294901760
        %574 = vmatpush.msra.mxu0 %v573
        %v575 = vand.u32 %v400, 4294901760
        %576 = vmatmul.f32.gmra.mxu0 %v575
        %v577 = vpop.f32.mrf.mxu0
        %v578 = vadd.f32 %v542, %v577
        %v579 = vand.u32 %v403, 4294901760
        %580 = vmatmul.f32.gmra.mxu0 %v579
        %v581 = vpop.f32.mrf.mxu0
        %v582 = vadd.f32 %v548, %v581
        %583 = vdwg.mxu0
        %584 = vmatpush.msra.mxu0 0.0
        %585 = vmatpush.msra.mxu0 0.0
        %586 = vmatpush.msra.mxu0 0.0
        %587 = vmatpush.msra.mxu0 0.0
        %588 = vmatpush.msra.mxu0 0.0
        %589 = vmatpush.msra.mxu0 0.0
        %590 = vmatpush.msra.mxu0 0.0
        %591 = vmatpush.msra.mxu0 0.0
        %592 = vmatpush.msra.mxu0 0.0
        %593 = vmatpush.msra.mxu0 0.0
        %594 = vmatpush.msra.mxu0 0.0
        %595 = vmatpush.msra.mxu0 0.0
        %596 = vmatpush.msra.mxu0 0.0
        %v597 = vand.u32 %v407, 4294901760
        %598 = vmatpush.msra.mxu0 %v597
        %v599 = vand.u32 %v396, 4294901760
        %600 = vmatpush.msra.mxu0 %v599
        %v601 = vand.u32 %v395, 4294901760
        %602 = vmatpush.msra.mxu0 %v601
        %v603 = vand.u32 %v400, 4294901760
        %604 = vmatmul.f32.gmra.mxu0 %v603
        %v605 = vpop.f32.mrf.mxu0
        %v606 = vadd.f32 %v578, %v605
        %v607 = vand.u32 %v403, 4294901760
        %608 = vmatmul.f32.gmra.mxu0 %v607
        %v609 = vpop.f32.mrf.mxu0
        %v610 = vadd.f32 %v582, %v609
        %611 = vdwg.mxu0
        %v612 = vstv %s393
        %v613 = vadd.f32 %v606, %v612
        %v614 = vadd.f32 %v610, %v612
        %v615 = vmax.f32 %v613, 0.0
        %v616 = vmax.f32 %v614, 0.0
        %v617 = vxor.u32 %v615, 2147483648
        %v618 = vxor.u32 %v616, 2147483648
        %v619 = vmul.f32 %v617, 1.442695
        %v620 = vpow.pop %v619
        %v621 = vmul.f32 %v618, 1.442695
        %v622 = vpow.pop %v621
        %v623 = vadd.f32 %v620, 1.0
        %v624 = vadd.f32 %v622, 1.0
        %v625 = vrcp.pop %v623
        %v626 = vmul.f32 %v623, %v625
        %v627 = vsub.f32 1.0, %v626
        %v628 = vmul.f32 %v625, %v627
        %v629 = vadd.f32 %v625, %v628
        %vm630 = vweird.f32 %v623
        %vm631 = vweird.f32 %v625
        %vm632 = vmor %vm630, %vm631
        %v633 = vsel %vm632, %v625, %v629
        %v634 = vand.u32 2147483647, %v623
        %vm635 = vcmp.eq.f32.partialorder %v634, 8.507059e+37
        %v636 = vand.u32 %v623, 2147483648
        %v637 = vor.u32 1.1754944e-38, %v636
        %v638 = vsel %vm635, %v637, %v633
        %v639 = vmul.f32 1.0, %v638
        %v640 = vrcp.pop %v624
        %v641 = vmul.f32 %v624, %v640
        %v642 = vsub.f32 1.0, %v641
        %v643 = vmul.f32 %v640, %v642
        %v644 = vadd.f32 %v640, %v643
        %vm645 = vweird.f32 %v624
        %vm646 = vweird.f32 %v640
        %vm647 = vmor %vm645, %vm646
        %v648 = vsel %vm647, %v640, %v644
        %v649 = vand.u32 2147483647, %v624
        %vm650 = vcmp.eq.f32.partialorder %v649, 8.507059e+37
        %v651 = vand.u32 %v624, 2147483648
        %v652 = vor.u32 1.1754944e-38, %v651
        %v653 = vsel %vm650, %v652, %v648
        %v654 = vmul.f32 1.0, %v653
        %v655 = vmul.f32 %v639, 6.2831855
        %v656 = vmul.f32 %v654, 6.2831855
        %v657 = vld [vmem:[%s4] sm:$0x1]
        %659 = vset.pattern.permute.xlu0 0
        %660 = vperm.xlu0 %659, %v655
        %v661 = vpop.permute.xlu0 %660
        %664 = vset.pattern.permute.xlu0 0
        %665 = vperm.xlu0 %664, %v656
        %v666 = vpop.permute.xlu0 %665
        %v669 = vperm.slane %v657, 0
        %v671 = vsub.f32 %v661, %v669
        %v672 = vsub.f32 %v666, %v669
        %v673 = vand.u32 2147483647, %v671
        %v674 = vand.u32 2147483647, %v672
        %v675 = vsub.f32 6.2831855, %v673
        %v676 = vsub.f32 6.2831855, %v674
        %v677 = vmin.f32 %v673, %v675
        %v678 = vmin.f32 %v674, %v676
        %v679 = vmul.f32 %v677, -3.2422779
        %v680 = vmul.f32 %v678, -3.2422779
        %v681 = vmul.f32 %v679, %v677
        %v682 = vmul.f32 %v680, %v678
        %v683 = vmul.f32 %v681, 1.442695
        %v684 = vpow.pop %v683
        %v685 = vmul.f32 %v682, 1.442695
        %v686 = vpow.pop %v685
        %v687 = vstv %s394
        %v688 = vadd.f32 %v606, %v687
        %v689 = vadd.f32 %v610, %v687
        %v690 = vmax.f32 %v688, 0.0
        %v691 = vmax.f32 %v689, 0.0
        %v692 = vmax.f32 %v690, 0.0
        %v693 = vmax.f32 %v691, 0.0
        %vm694 = vcmp.ne.f32.partialorder %v690, %v690
        %vm695 = vcmp.ne.f32.partialorder %v691, %v691
        %v696 = vadd.f32 %v690, 0.0
        %v697 = vadd.f32 %v691, 0.0
        %v698 = vand.u32 2147483647, %v690
        %v699 = vand.u32 2147483647, %v691
        %v700 = vsub.f32 0.0, %v698
        %v701 = vsub.f32 0.0, %v699
        %v702 = vmul.f32 %v700, 1.442695
        %v703 = vpow.pop %v702
        %v704 = vmul.f32 %v701, 1.442695
        %v705 = vpow.pop %v704
        %v706 = vadd.f32 %v703, 1.0
        %v707 = vlog2.pop %v706
        %v708 = vmul.f32 %v707, 0.6931472
        %v709 = vmul.f32 -0.5, %v703
        %v710 = vadd.f32 %v709, 1.0
        %v711 = vmul.f32 %v710, %v703
        %v712 = vand.u32 2147483647, %v703
        %vm713 = vcmp.lt.f32.partialorder %v712, 0.0004427343
        %v714 = vsel %vm713, %v711, %v708
        %v715 = vadd.f32 %v705, 1.0
        %v716 = vlog2.pop %v715
        %v717 = vmul.f32 %v716, 0.6931472
        %v718 = vmul.f32 -0.5, %v705
        %v719 = vadd.f32 %v718, 1.0
        %v720 = vmul.f32 %v719, %v705
        %v721 = vand.u32 2147483647, %v705
        %vm722 = vcmp.lt.f32.partialorder %v721, 0.0004427343
        %v723 = vsel %vm722, %v720, %v717
        %v724 = vadd.f32 %v692, %v714
        %v725 = vadd.f32 %v693, %v723
        %v726 = vsel %vm694, %v696, %v724
        %v727 = vsel %vm695, %v697, %v725
        %vm728 = vcmp.eq.f32.partialorder %v389, 0.0
        %vm729 = vcmp.eq.f32.partialorder %v390, 0.0
        %732 = vrot.lane.b32.xlu0 %v726, 15
        %v733 = vpop.permute.xlu0 %732
        %734 = vrot.lane.b32.xlu0 %v727, 15
        %v735 = vpop.permute.xlu0 %734
        %v738 = vsel %vm728, 0.0, %v733
        %v739 = vsel %vm729, 0.0, %v735
        %742 = vrot.lane.b32.xlu0 %v391, 8
        %v743 = vpop.permute.xlu0 %742
        %744 = vrot.lane.b32.xlu0 %v392, 8
        %v745 = vpop.permute.xlu0 %744
        %750 = vrot.lane.b32.xlu0 %v738, 124
        %v751 = vpop.permute.xlu0 %750
        %752 = vrot.lane.b32.xlu0 %v739, 124
        %v753 = vpop.permute.xlu0 %752
        %vm756 = vcmask 64512
        %v757 = vsel %vm756, %v684, %v743
        %v758 = vsel %vm756, %v686, %v745
        %vm759 = vcmask 97280
        %v760 = vsel %vm759, %v757, %v751
        %v761 = vsel %vm759, %v758, %v753
        %v762 = vld [vmem:[%s5] sm:$0xff]
        %v763 = vld [vmem:[%s5 + $0x8] sm:$0xff]
        %v764 = vld [vmem:[%s5 + $0x10] sm:$0x1f]
        %v765 = vld [vmem:[%s5 + $0x18] sm:$0x1f]
        %vm766 = vcmask 105472
        %v768 = vsel %vm766, %v760, 0
        %v771 = vsel %vm766, %v761, 0
        %vm773 = vcmask 1044480
        %v775 = vsel %vm773, %v764, 0
        %v778 = vsel %vm773, %v765, 0
        %780 = vmatpush.msra.mxu0 0.0
        %781 = vmatpush.msra.mxu0 0.0
        %782 = vmatpush.msra.mxu0 0.0
        %783 = vmatpush.msra.mxu0 0.0
        %784 = vmatpush.msra.mxu0 0.0
        %785 = vmatpush.msra.mxu0 0.0
        %786 = vmatpush.msra.mxu0 0.0
        %787 = vmatpush.msra.mxu0 0.0
        %788 = vmatpush.msra.mxu0 0.0
        %789 = vmatpush.msra.mxu0 0.0
        %790 = vmatpush.msra.mxu0 0.0
        %791 = vmatpush.msra.mxu0 0.0
        %792 = vmatpush.msra.mxu0 0.0
        %793 = vmatpush.msra.mxu0 0.0
        %v794 = vand.u32 %v775, 4294901760
        %795 = vmatpush.msra.mxu0 %v794
        %v796 = vand.u32 %v762, 4294901760
        %797 = vmatpush.msra.mxu0 %v796
        %v798 = vand.u32 %v768, 4294901760
        %v799 = vsub.f32 %v768, %v798
        %v800 = vand.u32 %v799, 4294901760
        %v801 = vsub.f32 %v799, %v800
        %v802 = vand.u32 %v801, 4294901760
        %803 = vmatmul.f32.gmra.mxu0 %v802
        %v804 = vpop.f32.mrf.mxu0
        %v805 = vadd.f32 0.0, %v804
        %v806 = vand.u32 %v771, 4294901760
        %v807 = vsub.f32 %v771, %v806
        %v808 = vand.u32 %v807, 4294901760
        %v809 = vsub.f32 %v807, %v808
        %v810 = vand.u32 %v809, 4294901760
        %811 = vmatmul.f32.gmra.mxu0 %v810
        %v812 = vpop.f32.mrf.mxu0
        %v813 = vadd.f32 0.0, %v812
        %814 = vdwg.mxu0
        %815 = vmatpush.msra.mxu0 0.0
        %816 = vmatpush.msra.mxu0 0.0
        %817 = vmatpush.msra.mxu0 0.0
        %818 = vmatpush.msra.mxu0 0.0
        %819 = vmatpush.msra.mxu0 0.0
        %820 = vmatpush.msra.mxu0 0.0
        %821 = vmatpush.msra.mxu0 0.0
        %822 = vmatpush.msra.mxu0 0.0
        %823 = vmatpush.msra.mxu0 0.0
        %824 = vmatpush.msra.mxu0 0.0
        %825 = vmatpush.msra.mxu0 0.0
        %826 = vmatpush.msra.mxu0 0.0
        %827 = vmatpush.msra.mxu0 0.0
        %828 = vmatpush.msra.mxu0 0.0
        %v829 = vand.u32 %v775, 4294901760
        %v830 = vsub.f32 %v775, %v829
        %v831 = vand.u32 %v830, 4294901760
        %v832 = vsub.f32 %v830, %v831
        %v833 = vand.u32 %v832, 4294901760
        %834 = vmatpush.msra.mxu0 %v833
        %v835 = vand.u32 %v762, 4294901760
        %v836 = vsub.f32 %v762, %v835
        %v837 = vand.u32 %v836, 4294901760
        %v838 = vsub.f32 %v836, %v837
        %v839 = vand.u32 %v838, 4294901760
        %840 = vmatpush.msra.mxu0 %v839
        %v841 = vand.u32 %v768, 4294901760
        %842 = vmatmul.f32.gmra.mxu0 %v841
        %v843 = vpop.f32.mrf.mxu0
        %v844 = vadd.f32 %v805, %v843
        %v845 = vand.u32 %v771, 4294901760
        %846 = vmatmul.f32.gmra.mxu0 %v845
        %v847 = vpop.f32.mrf.mxu0
        %v848 = vadd.f32 %v813, %v847
        %849 = vdwg.mxu0
        %850 = vmatpush.msra.mxu0 0.0
        %851 = vmatpush.msra.mxu0 0.0
        %852 = vmatpush.msra.mxu0 0.0
        %853 = vmatpush.msra.mxu0 0.0
        %854 = vmatpush.msra.mxu0 0.0
        %855 = vmatpush.msra.mxu0 0.0
        %856 = vmatpush.msra.mxu0 0.0
        %857 = vmatpush.msra.mxu0 0.0
        %858 = vmatpush.msra.mxu0 0.0
        %859 = vmatpush.msra.mxu0 0.0
        %860 = vmatpush.msra.mxu0 0.0
        %861 = vmatpush.msra.mxu0 0.0
        %862 = vmatpush.msra.mxu0 0.0
        %863 = vmatpush.msra.mxu0 0.0
        %v864 = vand.u32 %v775, 4294901760
        %v865 = vsub.f32 %v775, %v864
        %866 = vmatpush.msra.mxu0 %v865
        %v867 = vand.u32 %v762, 4294901760
        %v868 = vsub.f32 %v762, %v867
        %869 = vmatpush.msra.mxu0 %v868
        %v870 = vand.u32 %v768, 4294901760
        %v871 = vsub.f32 %v768, %v870
        %872 = vmatmul.f32.gmra.mxu0 %v871
        %v873 = vpop.f32.mrf.mxu0
        %v874 = vadd.f32 %v844, %v873
        %v875 = vand.u32 %v771, 4294901760
        %v876 = vsub.f32 %v771, %v875
        %877 = vmatmul.f32.gmra.mxu0 %v876
        %v878 = vpop.f32.mrf.mxu0
        %v879 = vadd.f32 %v848, %v878
        %880 = vdwg.mxu0
        %881 = vmatpush.msra.mxu0 0.0
        %882 = vmatpush.msra.mxu0 0.0
        %883 = vmatpush.msra.mxu0 0.0
        %884 = vmatpush.msra.mxu0 0.0
        %885 = vmatpush.msra.mxu0 0.0
        %886 = vmatpush.msra.mxu0 0.0
        %887 = vmatpush.msra.mxu0 0.0
        %888 = vmatpush.msra.mxu0 0.0
        %889 = vmatpush.msra.mxu0 0.0
        %890 = vmatpush.msra.mxu0 0.0
        %891 = vmatpush.msra.mxu0 0.0
        %892 = vmatpush.msra.mxu0 0.0
        %893 = vmatpush.msra.mxu0 0.0
        %894 = vmatpush.msra.mxu0 0.0
        %v895 = vand.u32 %v775, 4294901760
        %896 = vmatpush.msra.mxu0 %v895
        %v897 = vand.u32 %v762, 4294901760
        %898 = vmatpush.msra.mxu0 %v897
        %v899 = vand.u32 %v768, 4294901760
        %v900 = vsub.f32 %v768, %v899
        %v901 = vand.u32 %v900, 4294901760
        %902 = vmatmul.f32.gmra.mxu0 %v901
        %v903 = vpop.f32.mrf.mxu0
        %v904 = vadd.f32 %v874, %v903
        %v905 = vand.u32 %v771, 4294901760
        %v906 = vsub.f32 %v771, %v905
        %v907 = vand.u32 %v906, 4294901760
        %908 = vmatmul.f32.gmra.mxu0 %v907
        %v909 = vpop.f32.mrf.mxu0
        %v910 = vadd.f32 %v879, %v909
        %911 = vdwg.mxu0
        %912 = vmatpush.msra.mxu0 0.0
        %913 = vmatpush.msra.mxu0 0.0
        %914 = vmatpush.msra.mxu0 0.0
        %915 = vmatpush.msra.mxu0 0.0
        %916 = vmatpush.msra.mxu0 0.0
        %917 = vmatpush.msra.mxu0 0.0
        %918 = vmatpush.msra.mxu0 0.0
        %919 = vmatpush.msra.mxu0 0.0
        %920 = vmatpush.msra.mxu0 0.0
        %921 = vmatpush.msra.mxu0 0.0
        %922 = vmatpush.msra.mxu0 0.0
        %923 = vmatpush.msra.mxu0 0.0
        %924 = vmatpush.msra.mxu0 0.0
        %925 = vmatpush.msra.mxu0 0.0
        %v926 = vand.u32 %v775, 4294901760
        %v927 = vsub.f32 %v775, %v926
        %v928 = vand.u32 %v927, 4294901760
        %929 = vmatpush.msra.mxu0 %v928
        %v930 = vand.u32 %v762, 4294901760
        %v931 = vsub.f32 %v762, %v930
        %v932 = vand.u32 %v931, 4294901760
        %933 = vmatpush.msra.mxu0 %v932
        %v934 = vand.u32 %v768, 4294901760
        %935 = vmatmul.f32.gmra.mxu0 %v934
        %v936 = vpop.f32.mrf.mxu0
        %v937 = vadd.f32 %v904, %v936
        %v938 = vand.u32 %v771, 4294901760
        %939 = vmatmul.f32.gmra.mxu0 %v938
        %v940 = vpop.f32.mrf.mxu0
        %v941 = vadd.f32 %v910, %v940
        %942 = vdwg.mxu0
        %943 = vmatpush.msra.mxu0 0.0
        %944 = vmatpush.msra.mxu0 0.0
        %945 = vmatpush.msra.mxu0 0.0
        %946 = vmatpush.msra.mxu0 0.0
        %947 = vmatpush.msra.mxu0 0.0
        %948 = vmatpush.msra.mxu0 0.0
        %949 = vmatpush.msra.mxu0 0.0
        %950 = vmatpush.msra.mxu0 0.0
        %951 = vmatpush.msra.mxu0 0.0
        %952 = vmatpush.msra.mxu0 0.0
        %953 = vmatpush.msra.mxu0 0.0
        %954 = vmatpush.msra.mxu0 0.0
        %955 = vmatpush.msra.mxu0 0.0
        %956 = vmatpush.msra.mxu0 0.0
        %v957 = vand.u32 %v775, 4294901760
        %958 = vmatpush.msra.mxu0 %v957
        %v959 = vand.u32 %v762, 4294901760
        %960 = vmatpush.msra.mxu0 %v959
        %v961 = vand.u32 %v768, 4294901760
        %962 = vmatmul.f32.gmra.mxu0 %v961
        %v963 = vpop.f32.mrf.mxu0
        %v964 = vadd.f32 %v937, %v963
        %v965 = vand.u32 %v771, 4294901760
        %966 = vmatmul.f32.gmra.mxu0 %v965
        %v967 = vpop.f32.mrf.mxu0
        %v968 = vadd.f32 %v941, %v967
        %969 = vdwg.mxu0
        %970 = vmatpush.msra.mxu0 0.0
        %971 = vmatpush.msra.mxu0 0.0
        %972 = vmatpush.msra.mxu0 0.0
        %973 = vmatpush.msra.mxu0 0.0
        %974 = vmatpush.msra.mxu0 0.0
        %975 = vmatpush.msra.mxu0 0.0
        %976 = vmatpush.msra.mxu0 0.0
        %977 = vmatpush.msra.mxu0 0.0
        %978 = vmatpush.msra.mxu0 0.0
        %979 = vmatpush.msra.mxu0 0.0
        %980 = vmatpush.msra.mxu0 0.0
        %981 = vmatpush.msra.mxu0 0.0
        %982 = vmatpush.msra.mxu0 0.0
        %983 = vmatpush.msra.mxu0 0.0
        %v984 = vand.u32 %v778, 4294901760
        %985 = vmatpush.msra.mxu0 %v984
        %v986 = vand.u32 %v763, 4294901760
        %987 = vmatpush.msra.mxu0 %v986
        %v988 = vand.u32 %v768, 4294901760
        %v989 = vsub.f32 %v768, %v988
        %v990 = vand.u32 %v989, 4294901760
        %v991 = vsub.f32 %v989, %v990
        %v992 = vand.u32 %v991, 4294901760
        %993 = vmatmul.f32.gmra.mxu0 %v992
        %v994 = vpop.f32.mrf.mxu0
        %v995 = vadd.f32 0.0, %v994
        %v996 = vand.u32 %v771, 4294901760
        %v997 = vsub.f32 %v771, %v996
        %v998 = vand.u32 %v997, 4294901760
        %v999 = vsub.f32 %v997, %v998
        %v1000 = vand.u32 %v999, 4294901760
        %1001 = vmatmul.f32.gmra.mxu0 %v1000
        %v1002 = vpop.f32.mrf.mxu0
        %v1003 = vadd.f32 0.0, %v1002
        %1004 = vdwg.mxu0
        %1005 = vmatpush.msra.mxu0 0.0
        %1006 = vmatpush.msra.mxu0 0.0
        %1007 = vmatpush.msra.mxu0 0.0
        %1008 = vmatpush.msra.mxu0 0.0
        %1009 = vmatpush.msra.mxu0 0.0
        %1010 = vmatpush.msra.mxu0 0.0
        %1011 = vmatpush.msra.mxu0 0.0
        %1012 = vmatpush.msra.mxu0 0.0
        %1013 = vmatpush.msra.mxu0 0.0
        %1014 = vmatpush.msra.mxu0 0.0
        %1015 = vmatpush.msra.mxu0 0.0
        %1016 = vmatpush.msra.mxu0 0.0
        %1017 = vmatpush.msra.mxu0 0.0
        %1018 = vmatpush.msra.mxu0 0.0
        %v1019 = vand.u32 %v778, 4294901760
        %v1020 = vsub.f32 %v778, %v1019
        %v1021 = vand.u32 %v1020, 4294901760
        %v1022 = vsub.f32 %v1020, %v1021
        %v1023 = vand.u32 %v1022, 4294901760
        %1024 = vmatpush.msra.mxu0 %v1023
        %v1025 = vand.u32 %v763, 4294901760
        %v1026 = vsub.f32 %v763, %v1025
        %v1027 = vand.u32 %v1026, 4294901760
        %v1028 = vsub.f32 %v1026, %v1027
        %v1029 = vand.u32 %v1028, 4294901760
        %1030 = vmatpush.msra.mxu0 %v1029
        %v1031 = vand.u32 %v768, 4294901760
        %1032 = vmatmul.f32.gmra.mxu0 %v1031
        %v1033 = vpop.f32.mrf.mxu0
        %v1034 = vadd.f32 %v995, %v1033
        %v1035 = vand.u32 %v771, 4294901760
        %1036 = vmatmul.f32.gmra.mxu0 %v1035
        %v1037 = vpop.f32.mrf.mxu0
        %v1038 = vadd.f32 %v1003, %v1037
        %1039 = vdwg.mxu0
        %1040 = vmatpush.msra.mxu0 0.0
        %1041 = vmatpush.msra.mxu0 0.0
        %1042 = vmatpush.msra.mxu0 0.0
        %1043 = vmatpush.msra.mxu0 0.0
        %1044 = vmatpush.msra.mxu0 0.0
        %1045 = vmatpush.msra.mxu0 0.0
        %1046 = vmatpush.msra.mxu0 0.0
        %1047 = vmatpush.msra.mxu0 0.0
        %1048 = vmatpush.msra.mxu0 0.0
        %1049 = vmatpush.msra.mxu0 0.0
        %1050 = vmatpush.msra.mxu0 0.0
        %1051 = vmatpush.msra.mxu0 0.0
        %1052 = vmatpush.msra.mxu0 0.0
        %1053 = vmatpush.msra.mxu0 0.0
        %v1054 = vand.u32 %v778, 4294901760
        %v1055 = vsub.f32 %v778, %v1054
        %1056 = vmatpush.msra.mxu0 %v1055
        %v1057 = vand.u32 %v763, 4294901760
        %v1058 = vsub.f32 %v763, %v1057
        %1059 = vmatpush.msra.mxu0 %v1058
        %v1060 = vand.u32 %v768, 4294901760
        %v1061 = vsub.f32 %v768, %v1060
        %1062 = vmatmul.f32.gmra.mxu0 %v1061
        %v1063 = vpop.f32.mrf.mxu0
        %v1064 = vadd.f32 %v1034, %v1063
        %v1065 = vand.u32 %v771, 4294901760
        %v1066 = vsub.f32 %v771, %v1065
        %1067 = vmatmul.f32.gmra.mxu0 %v1066
        %v1068 = vpop.f32.mrf.mxu0
        %v1069 = vadd.f32 %v1038, %v1068
        %1070 = vdwg.mxu0
        %1071 = vmatpush.msra.mxu0 0.0
        %1072 = vmatpush.msra.mxu0 0.0
        %1073 = vmatpush.msra.mxu0 0.0
        %1074 = vmatpush.msra.mxu0 0.0
        %1075 = vmatpush.msra.mxu0 0.0
        %1076 = vmatpush.msra.mxu0 0.0
        %1077 = vmatpush.msra.mxu0 0.0
        %1078 = vmatpush.msra.mxu0 0.0
        %1079 = vmatpush.msra.mxu0 0.0
        %1080 = vmatpush.msra.mxu0 0.0
        %1081 = vmatpush.msra.mxu0 0.0
        %1082 = vmatpush.msra.mxu0 0.0
        %1083 = vmatpush.msra.mxu0 0.0
        %1084 = vmatpush.msra.mxu0 0.0
        %v1085 = vand.u32 %v778, 4294901760
        %1086 = vmatpush.msra.mxu0 %v1085
        %v1087 = vand.u32 %v763, 4294901760
        %1088 = vmatpush.msra.mxu0 %v1087
        %v1089 = vand.u32 %v768, 4294901760
        %v1090 = vsub.f32 %v768, %v1089
        %v1091 = vand.u32 %v1090, 4294901760
        %1092 = vmatmul.f32.gmra.mxu0 %v1091
        %v1093 = vpop.f32.mrf.mxu0
        %v1094 = vadd.f32 %v1064, %v1093
        %v1095 = vand.u32 %v771, 4294901760
        %v1096 = vsub.f32 %v771, %v1095
        %v1097 = vand.u32 %v1096, 4294901760
        %1098 = vmatmul.f32.gmra.mxu0 %v1097
        %v1099 = vpop.f32.mrf.mxu0
        %v1100 = vadd.f32 %v1069, %v1099
        %1101 = vdwg.mxu0
        %1102 = vmatpush.msra.mxu0 0.0
        %1103 = vmatpush.msra.mxu0 0.0
        %1104 = vmatpush.msra.mxu0 0.0
        %1105 = vmatpush.msra.mxu0 0.0
        %1106 = vmatpush.msra.mxu0 0.0
        %1107 = vmatpush.msra.mxu0 0.0
        %1108 = vmatpush.msra.mxu0 0.0
        %1109 = vmatpush.msra.mxu0 0.0
        %1110 = vmatpush.msra.mxu0 0.0
        %1111 = vmatpush.msra.mxu0 0.0
        %1112 = vmatpush.msra.mxu0 0.0
        %1113 = vmatpush.msra.mxu0 0.0
        %1114 = vmatpush.msra.mxu0 0.0
        %1115 = vmatpush.msra.mxu0 0.0
        %v1116 = vand.u32 %v778, 4294901760
        %v1117 = vsub.f32 %v778, %v1116
        %v1118 = vand.u32 %v1117, 4294901760
        %1119 = vmatpush.msra.mxu0 %v1118
        %v1120 = vand.u32 %v763, 4294901760
        %v1121 = vsub.f32 %v763, %v1120
        %v1122 = vand.u32 %v1121, 4294901760
        %1123 = vmatpush.msra.mxu0 %v1122
        %v1124 = vand.u32 %v768, 4294901760
        %1125 = vmatmul.f32.gmra.mxu0 %v1124
        %v1126 = vpop.f32.mrf.mxu0
        %v1127 = vadd.f32 %v1094, %v1126
        %v1128 = vand.u32 %v771, 4294901760
        %1129 = vmatmul.f32.gmra.mxu0 %v1128
        %v1130 = vpop.f32.mrf.mxu0
        %v1131 = vadd.f32 %v1100, %v1130
        %1132 = vdwg.mxu0
        %1133 = vmatpush.msra.mxu0 0.0
        %1134 = vmatpush.msra.mxu0 0.0
        %1135 = vmatpush.msra.mxu0 0.0
        %1136 = vmatpush.msra.mxu0 0.0
        %1137 = vmatpush.msra.mxu0 0.0
        %1138 = vmatpush.msra.mxu0 0.0
        %1139 = vmatpush.msra.mxu0 0.0
        %1140 = vmatpush.msra.mxu0 0.0
        %1141 = vmatpush.msra.mxu0 0.0
        %1142 = vmatpush.msra.mxu0 0.0
        %1143 = vmatpush.msra.mxu0 0.0
        %1144 = vmatpush.msra.mxu0 0.0
        %1145 = vmatpush.msra.mxu0 0.0
        %1146 = vmatpush.msra.mxu0 0.0
        %v1147 = vand.u32 %v778, 4294901760
        %1148 = vmatpush.msra.mxu0 %v1147
        %v1149 = vand.u32 %v763, 4294901760
        %1150 = vmatpush.msra.mxu0 %v1149
        %v1151 = vand.u32 %v768, 4294901760
        %1152 = vmatmul.f32.gmra.mxu0 %v1151
        %v1153 = vpop.f32.mrf.mxu0
        %v1154 = vadd.f32 %v1127, %v1153
        %v1155 = vand.u32 %v771, 4294901760
        %1156 = vmatmul.f32.gmra.mxu0 %v1155
        %v1157 = vpop.f32.mrf.mxu0
        %v1158 = vadd.f32 %v1131, %v1157
        %1159 = vdwg.mxu0
        %v1160 = vmax.f32 %v964, %v1154
        %1161 = vmax.xlane.f32.xlu0 %v1160
        %v1162 = vpop.xlane.xlu0 %1161
        %v1163 = vmax.f32 %v968, %v1158
        %1164 = vmax.xlane.f32.xlu0 %v1163
        %v1165 = vpop.xlane.xlu0 %1164
        %v1166 = vsub.f32 %v964, %v1162
        %v1167 = vsub.f32 %v1154, %v1162
        %v1168 = vsub.f32 %v968, %v1165
        %v1169 = vsub.f32 %v1158, %v1165
        %v1170 = vmul.f32 %v1166, 1.442695
        %v1171 = vpow.pop %v1170
        %v1172 = vmul.f32 %v1167, 1.442695
        %v1173 = vpow.pop %v1172
        %v1174 = vmul.f32 %v1168, 1.442695
        %v1175 = vpow.pop %v1174
        %v1176 = vmul.f32 %v1169, 1.442695
        %v1177 = vpow.pop %v1176
        %v1178 = vadd.f32 %v1171, %v1173
        %1179 = vadd.xlane.f32.xlu0 %v1178
        %v1180 = vpop.xlane.xlu0 %1179
        %v1181 = vadd.f32 %v1175, %v1177
        %1182 = vadd.xlane.f32.xlu0 %v1181
        %v1183 = vpop.xlane.xlu0 %1182
        %v1184 = vrcp.pop %v1180
        %v1185 = vrcp.pop %v1183
        %v1186 = vmul.f32 %v1180, %v1184
        %v1187 = vmul.f32 %v1183, %v1185
        %v1188 = vsub.f32 2.0, %v1186
        %v1189 = vsub.f32 2.0, %v1187
        %v1190 = vmul.f32 %v1184, %v1188
        %v1191 = vmul.f32 %v1185, %v1189
        %v1192 = vmul.f32 %v1171, %v1190
        %v1193 = vmul.f32 %v1173, %v1190
        %v1194 = vmul.f32 %v1175, %v1191
        %v1195 = vmul.f32 %v1177, %v1191
        %1196 = vst [vmem:[%s351] sm:$0xff] %v1192
        %1197 = vst [vmem:[%s351 + $0x8] sm:$0xff] %v1193
        %1198 = vst [vmem:[%s351 + $0x10] sm:$0xff] %v1194
        %1199 = vst [vmem:[%s351 + $0x18] sm:$0xff] %v1195
        %1200 = vrot.lane.b32.xlu0 %v738, 120
        %v1201 = vpop.permute.xlu0 %1200
        %1202 = vrot.lane.b32.xlu0 %v739, 120
        %v1203 = vpop.permute.xlu0 %1202
        %1206 = vrot.lane.b32.xlu0 %v655, 9
        %v1207 = vpop.permute.xlu0 %1206
        %1208 = vrot.lane.b32.xlu0 %v656, 9
        %v1209 = vpop.permute.xlu0 %1208
        %v1212 = vsel %vm756, %v684, %v1201
        %v1213 = vsel %vm756, %v686, %v1203
        %vm1214 = vcmask 72704
        %v1215 = vsel %vm1214, %v1212, %v1207
        %v1216 = vsel %vm1214, %v1213, %v1209
        %vm1217 = vcmask 80896
        %v1218 = vsel %vm1217, %v1215, 0.0
        %v1219 = vsel %vm1217, %v1216, 0.0
        %1220 = vst [vmem:[%s358] sm:$0xff] %v1218
        %1221 = vst [vmem:[%s358 + $0x8] sm:$0xff] %v1219
        %s1222 = sand.u32 %s173, 1
        %s1223 = scalar_lea.sflag [#allocation4], %s1222
        %s1224 = sand.u32 %s173, 1
        %s1225 = smul.addr %s1224, 32
        %s1226 = scalar_lea.vmem [#allocation7], %s1225
        %s1227 = sand.u32 %s199, 1
        %s1228 = scalar_lea.sflag [#allocation9], %s1227
        %s1229 = sand.u32 %s199, 1
        %s1230 = smul.addr %s1229, 16
        %s1231 = scalar_lea.vmem [#allocation8], %s1230
        // Predicated region
        $region53: #{tpu_custom_call.1} parent=43 // pred_check
          %p1232 = pneg %p183
        $region54: #{tpu_custom_call.1} parent=43 // pred_check_branch
          %1234 = sbr.rel (%p1232) target = $region56
        $region55: #{tpu_custom_call.1} parent=43 // pred_region
          %s1235 = smul.u32 2, %s29
          %s1236 = ssub.s32 3, %s1235
          %p1237 = scmp.lt.s32.totalorder %s1236, 2
          %s1238 = scalar_select %p1237, %s1236, 2
          %s1239 = smul.u32 8, %s1238
          %s1240 = smul.u32 %s1239, 2
          %s1241 = ssub.s32 32, %s1240
          %s1242 = sshll.u32 %s1241, 4
          %1243 = vsyncadd %s1223, %s1242
          %p1244 = scmp.ne.s32.totalorder 0, %s1240
          %s1245 = smul.addr %s1235, 2
          %s1246 = smul.addr %s1245, 8
          %s1247 = scalar_lea.hbm %s6, %s1246
          %s1248 = smul.u32 16, %s1238
          %s1249 = sshll.u32 %s1226, 4
          %s1250 = int_to_ptr.vmem [resolvable:$true] %s1249
          %s1251 = sshll.u32 %s1247, 4
          %s1252 = int_to_ptr.hbm [resolvable:$true] %s1251
          %s1253 = sshll.u32 %s1248, 4
          %1257 = dma.vmem_to_hbm [thread:$0]  (%p1244), %s1250, %s1253, %s1252, %s1223, 256, 256, 16
        $region56: #{tpu_custom_call.1} parent=43 // pred_fallthru
          _
        // Predicated region
        $region57: #{tpu_custom_call.1} parent=43 // pred_check
          %p1258 = pneg %p209
        $region58: #{tpu_custom_call.1} parent=43 // pred_check_branch
          %1260 = sbr.rel (%p1258) target = $region60
        $region59: #{tpu_custom_call.1} parent=43 // pred_region
          %s1261 = smul.u32 2, %s29
          %s1262 = ssub.s32 3, %s1261
          %p1263 = scmp.lt.s32.totalorder %s1262, 2
          %s1264 = scalar_select %p1263, %s1262, 2
          %s1265 = smul.u32 8, %s1264
          %s1266 = ssub.s32 16, %s1265
          %s1267 = sshll.u32 %s1266, 4
          %1268 = vsyncadd %s1228, %s1267
          %p1269 = scmp.ne.s32.totalorder 0, %s1265
          %s1270 = smul.addr %s1261, 8
          %s1271 = scalar_lea.hbm %s7, %s1270
          %s1272 = smul.u32 8, %s1264
          %s1273 = sshll.u32 %s1231, 4
          %s1274 = int_to_ptr.vmem [resolvable:$true] %s1273
          %s1275 = sshll.u32 %s1271, 4
          %s1276 = int_to_ptr.hbm [resolvable:$true] %s1275
          %s1277 = sshll.u32 %s1272, 4
          %1281 = dma.vmem_to_hbm [thread:$0]  (%p1269), %s1274, %s1277, %s1276, %s1228, 128, 128, 8
        $region60: #{tpu_custom_call.1} parent=43 // pred_fallthru
          _
      $region44: #{tpu_custom_call.1} parent=5 // pred_fallthru
        _
      %p1282 = scmp.le.s32.totalorder 2, %s24
      // Predicated region
      $region61: #{tpu_custom_call.1} parent=5 // pred_check
        %p1283 = pneg %p1282
      $region62: #{tpu_custom_call.1} parent=5 // pred_check_branch
        %1285 = sbr.rel (%p1283) target = $region64
      $region63: #{tpu_custom_call.1} parent=5 // pred_region
        %s1286 = ssub.s32 %s24, 2
        // Predicated region
        $region65: #{tpu_custom_call.1} parent=63 // pred_check
          %p1287 = pneg %p189
        $region66: #{tpu_custom_call.1} parent=63 // pred_check_branch
          %1289 = sbr.rel (%p1287) target = $region68
        $region67: #{tpu_custom_call.1} parent=63 // pred_region
          %s1290 = sand.u32 %s174, 1
          %s1291 = scalar_lea.sflag [#allocation4], %s1290
          %s1292 = sand.u32 %s174, 1
          %s1293 = smul.addr %s1292, 32
          %s1294 = scalar_lea.vmem [#allocation7], %s1293
          %1296 = dma.done %s1291, 512
        $region68: #{tpu_custom_call.1} parent=63 // pred_fallthru
          _
        // Predicated region
        $region69: #{tpu_custom_call.1} parent=63 // pred_check
          %p1297 = pneg %p215
        $region70: #{tpu_custom_call.1} parent=63 // pred_check_branch
          %1299 = sbr.rel (%p1297) target = $region72
        $region71: #{tpu_custom_call.1} parent=63 // pred_region
          %s1300 = sand.u32 %s200, 1
          %s1301 = scalar_lea.sflag [#allocation9], %s1300
          %s1302 = sand.u32 %s200, 1
          %s1303 = smul.addr %s1302, 16
          %s1304 = scalar_lea.vmem [#allocation8], %s1303
          %1306 = dma.done %s1301, 256
        $region72: #{tpu_custom_call.1} parent=63 // pred_fallthru
          _
      $region64: #{tpu_custom_call.1} parent=5 // pred_fallthru
        _
    $region6: #{tpu_custom_call.1} parent=1 // loop_footer
      %s28 = sadd.s32 1, %s24
    $region7: #{tpu_custom_call.1} parent=1 // loop_footer_branch
      %23 = sbr.rel target = $region3
    $region8: #{tpu_custom_call.1} parent=1 // loop_exit
      _
    %1307 = vsyncpa [#allocation3], 1
    %s1308 = scalar_lea.sflag [#allocation3], 1
    %1309 = vsyncpa %s1308, 1
    %1310 = vsyncpa [#allocation4], 1
    %s1311 = scalar_lea.sflag [#allocation4], 1
    %1312 = vsyncpa %s1311, 1
    %1313 = vsyncpa [#allocation9], 1
    %s1314 = scalar_lea.sflag [#allocation9], 1
    %1315 = vsyncpa %s1314, 1
    %1316 = vsyncpa [#allocation5], 1
    %s1317 = scalar_lea.sflag [#allocation5], 1
    %1318 = vsyncpa %s1317, 1

</llo_original>
